<compile_context>
chip_gen: v5e
topology: v5e:2x2
jax: 0.10.0
libtpu: 0.0.40
codegen_flags: <defaults>
</compile_context>

<pallas_src>
import jax
import jax.numpy as jnp
import numpy as np
from jax import lax
from jax.experimental import pallas as pl
from jax.experimental.pallas import tpu as pltpu

_PREC = lax.Precision.HIGHEST  # f32-accurate MXU passes (bf16 would fail tol)


def _round_up(x, d):
    return (x + d - 1) // d * d


# --------------------------------------------------------------------------
# Pass 1: batched dot products on the MXU.
#   v_ref : (2, Kp, tn)   packed [re, im] planes of V rows 0..j (zero padded)
#   r_ref : (8, tn)       rows [b_re, b_im, vjm1_re, vjm1_im, vj_re, vj_im, 0, 0]
#   s_ref : (2, Kp, 8)    accumulated  V_plane @ R^T  over the lane tiles
# --------------------------------------------------------------------------
def _dots_kernel(v_ref, r_ref, s_ref):
    t = pl.program_id(0)

    @pl.when(t == 0)
    def _():
        s_ref[...] = jnp.zeros_like(s_ref)

    r = r_ref[...]
    dn = (((1,), (1,)), ((), ()))  # contract last dims: A @ B^T
    s_ref[0] += lax.dot_general(v_ref[0], r, dn,
                                precision=_PREC,
                                preferred_element_type=jnp.float32)
    s_ref[1] += lax.dot_general(v_ref[1], r, dn,
                                precision=_PREC,
                                preferred_element_type=jnp.float32)


# --------------------------------------------------------------------------
# Pass 2: subtract the combined projection and accumulate |residual|^2.
#   v_ref : (2, Kp, tn)   packed V planes (same as pass 1)
#   b_ref : (2, tn)       packed [re, im] of the original candidate vector
#   c_ref : (2, Kp)       combined complex coefficients, rows [c_re, c_im]
#   o_ref : (2, tn)       un-normalized residual
#   ss_ref: (1, 1)        accumulated squared norm
# --------------------------------------------------------------------------
def _subtract_kernel(v_ref, b_ref, c_ref, o_ref, ss_ref):
    t = pl.program_id(0)

    @pl.when(t == 0)
    def _():
        ss_ref[...] = jnp.zeros_like(ss_ref)

    c = c_ref[...]                                            # (2, Kp)
    p = jnp.dot(c, v_ref[0], precision=_PREC,
                preferred_element_type=jnp.float32)           # (2, tn)
    q = jnp.dot(c, v_ref[1], precision=_PREC,
                preferred_element_type=jnp.float32)           # (2, tn)
    # complex: corr_re = c_re@V_re - c_im@V_im ; corr_im = c_re@V_im + c_im@V_re
    corr = jnp.concatenate([p[0:1] - q[1:2], p[1:2] + q[0:1]], axis=0)
    res = b_ref[...] - corr
    o_ref[...] = res
    ss_ref[...] += jnp.sum(res * res)


def lanczos_step(buf1, V, T, j, m, *, lane_tile=2048):
    """JAX/Pallas equivalent of LanczosStepTorch.forward.

    buf1: complex (N,), V: complex (K, N), T: complex (M, M); j, m python ints.
    Returns (buf1_out complex64 (N,), T_out complex64 (M, M), beta f32 scalar).
    """
    del m  # only used for sizing on the PyTorch side
    N = buf1.shape[0]
    K = V.shape[0]
    M = T.shape[0]
    f32 = jnp.float32

    # ---- sizes / padding --------------------------------------------------
    tn = min(lane_tile, _round_up(N, 128))   # lane tile (multiple of 128)
    Npad = _round_up(N, tn)
    n_tiles = Npad // tn
    Kp = max(8, _round_up(j + 1, 8))         # sublane-aligned row count

    b_re = jnp.real(buf1).astype(f32)
    b_im = jnp.imag(buf1).astype(f32)
    V_re = jnp.real(V).astype(f32)
    V_im = jnp.imag(V).astype(f32)

    def pad_lane(x):
        pad = Npad - x.shape[-1]
        if pad:
            x = jnp.pad(x, [(0, 0)] * (x.ndim - 1) + [(0, pad)])
        return x

    # Only the rows that are actually used (0..j), zero-padded to Kp rows.
    nrows = min(j + 1, K)
    Vu_re = pad_lane(V_re[:nrows])
    Vu_im = pad_lane(V_im[:nrows])
    if nrows < Kp:
        zrows = jnp.zeros((Kp - nrows, Npad), f32)
        Vu_re = jnp.concatenate([Vu_re, zrows], axis=0)
        Vu_im = jnp.concatenate([Vu_im, zrows], axis=0)
    V2 = jnp.stack([Vu_re, Vu_im])                        # (2, Kp, Npad)

    b2 = pad_lane(jnp.stack([b_re, b_im]))                # (2, Npad)

    if j > 0:
        vjm1_re, vjm1_im = V_re[j - 1], V_im[j - 1]
    else:
        vjm1_re = jnp.zeros((N,), f32)
        vjm1_im = jnp.zeros((N,), f32)
    vj_re, vj_im = V_re[j], V_im[j]
    zrow = jnp.zeros((N,), f32)
    R8 = pad_lane(jnp.stack(
        [b_re, b_im, vjm1_re, vjm1_im, vj_re, vj_im, zrow, zrow]))  # (8, Npad)

    cparams = pltpu.CompilerParams(
        dimension_semantics=("arbitrary",),     # accumulators resident over tiles
        vmem_limit_bytes=32 * 1024 * 1024)

    # ---- pass 1: all dot products in two matmuls per lane tile ------------
    s = pl.pallas_call(
        _dots_kernel,
        out_shape=jax.ShapeDtypeStruct((2, Kp, 8), f32),
        grid=(n_tiles,),
        in_specs=[pl.BlockSpec((2, Kp, tn), lambda t: (0, 0, t)),
                  pl.BlockSpec((8, tn), lambda t: (0, t))],
        out_specs=pl.BlockSpec((2, Kp, 8), lambda t: (0, 0, 0)),
        compiler_params=cparams,
    )(V2, R8)

    # ---- tiny O(K) complex algebra (plain jnp; negligible work) -----------
    A, Bm = s[0], s[1]                                    # (Kp, 8) each
    vb = (A[:, 0] + Bm[:, 1]) + 1j * (A[:, 1] - Bm[:, 0])   # <V[i], b0>
    g1 = (A[:, 2] + Bm[:, 3]) + 1j * (A[:, 3] - Bm[:, 2])   # <V[i], V[j-1]>
    g2 = (A[:, 4] + Bm[:, 5]) + 1j * (A[:, 5] - Bm[:, 4])   # <V[i], V[j]>

    if j > 0:
        d1 = vb[j - 1]
    else:
        d1 = jnp.asarray(0.0, jnp.complex64)
    d2 = vb[j] - d1 * g1[j]
    h = vb - d1 * g1 - d2 * g2
    row_ids = jnp.arange(Kp)
    c = jnp.where(row_ids <= j, h, 0.0)
    c = c.at[j].add(d2)
    if j > 0:
        c = c.at[j - 1].add(d1)
    C2 = jnp.stack([jnp.real(c), jnp.imag(c)]).astype(f32)  # (2, Kp)

    # ---- pass 2: subtract combined projection, accumulate |res|^2 ---------
    b3, ss = pl.pallas_call(
        _subtract_kernel,
        out_shape=(jax.ShapeDtypeStruct((2, Npad), f32),
                   jax.ShapeDtypeStruct((1, 1), f32)),
        grid=(n_tiles,),
        in_specs=[pl.BlockSpec((2, Kp, tn), lambda t: (0, 0, t)),
                  pl.BlockSpec((2, tn), lambda t: (0, t)),
                  pl.BlockSpec((2, Kp), lambda t: (0, 0))],
        out_specs=(pl.BlockSpec((2, tn), lambda t: (0, t)),
                   pl.BlockSpec((1, 1), lambda t: (0, 0))),
        compiler_params=cparams,
    )(V2, b2, C2)

    # ---- epilogue: beta, normalization, T entries --------------------------
    ss = ss[0, 0]
    beta = jnp.sqrt(ss)
    pos = ss > 0.0
    inv = jnp.where(pos, lax.rsqrt(jnp.where(pos, ss, 1.0)), 1.0)
    buf1_out = ((b3[0, :N] * inv) + 1j * (b3[1, :N] * inv)).astype(jnp.complex64)

    T_out = T.astype(jnp.complex64)
    if j > 0:
        T_out = T_out.at[j - 1, j].set(d1.astype(jnp.complex64))
        T_out = T_out.at[j, j - 1].set(jnp.conj(d1).astype(jnp.complex64))
    T_out = T_out.at[j, j].set(d2.astype(jnp.complex64))
    if j + 1 < M:   # mirrors the reference's index range (callers use j < m)
        beta_c = beta.astype(jnp.complex64)
        T_out = T_out.at[j, j + 1].set(jnp.where(pos, beta_c, T_out[j, j + 1]))
        T_out = T_out.at[j + 1, j].set(jnp.where(pos, beta_c, T_out[j + 1, j]))

    return buf1_out, T_out, beta.astype(f32)


def _numpy_reference(buf1, V, T, j, m):
    buf1_out = np.array(buf1, dtype=np.complex128).copy()
    V = np.array(V, dtype=np.complex128)
    T_out = np.array(T, dtype=np.complex128).copy()
    if j > 0:
        d = np.vdot(V[j - 1], buf1_out)
        T_out[j - 1, j] = d
        T_out[j, j - 1] = np.conj(d)
        buf1_out = buf1_out - d * V[j - 1]
    d = np.vdot(V[j], buf1_out)
    T_out[j, j] = d
    buf1_out = buf1_out - d * V[j]
    h = np.zeros(j + 1, dtype=buf1_out.dtype)
    for i in range(j + 1):
        h[i] = np.vdot(V[i], buf1_out)
    for i in range(j + 1):
        buf1_out = buf1_out - h[i] * V[i]
    beta = float(np.linalg.norm(buf1_out))
    if beta > 0.0:
        T_out[j, j + 1] = beta
        T_out[j + 1, j] = beta
        buf1_out = buf1_out / beta
    return buf1_out, T_out, beta


if __name__ == "__main__":
    N = 2048        # vector length (lane dimension)
    m = 8           # Krylov subspace size
    K = m + 1       # number of stored basis vectors
    M = m + 1       # T is (m+1, m+1)
    j = 3           # current Lanczos step

    key = jax.random.PRNGKey(0)
    k1, k2, k3, k4, k5, k6 = jax.random.split(key, 6)

    buf1 = (jax.random.normal(k1, (N,), jnp.float32)
            + 1j * jax.random.normal(k2, (N,), jnp.float32)).astype(jnp.complex64)
    V = (jax.random.normal(k3, (K, N), jnp.float32)
         + 1j * jax.random.normal(k4, (K, N), jnp.float32)).astype(jnp.complex64)
    V = V / jnp.linalg.norm(V, axis=1, keepdims=True)
    T = (0.1 * jax.random.normal(k5, (M, M), jnp.float32)
         + 0.1j * jax.random.normal(k6, (M, M), jnp.float32)).astype(jnp.complex64)

    # lane_tile=512 so the small demo still exercises the multi-tile /
    # accumulator / pipelined path (4 lane tiles).
    buf1_out, T_out, beta = lanczos_step(buf1, V, T, j, m, lane_tile=512)
    jax.block_until_ready((buf1_out, T_out, beta))
    beta_val = float(beta)

    # correctness check against a float64 numpy reference
    ref_buf, ref_T, ref_beta = _numpy_reference(
        np.asarray(buf1), np.asarray(V), np.asarray(T), j, m)
    np.testing.assert_allclose(np.asarray(buf1_out), ref_buf, rtol=2e-3, atol=2e-3)
    np.testing.assert_allclose(np.asarray(T_out), ref_T, rtol=2e-3, atol=2e-3)
    np.testing.assert_allclose(beta_val, ref_beta, rtol=2e-3, atol=2e-3)

    print("KERNEL_OK")
</pallas_src>

<mosaic_0001>
module attributes {stable_mosaic.version = 11 : i64} {
  func.func @_dots_kernel(%arg0: i32, %arg1: memref<2x8x512xf32, #tpu.memory_space<vmem>>, %arg2: memref<8x512xf32, #tpu.memory_space<vmem>>, %arg3: memref<2x8x8xf32, #tpu.memory_space<vmem>>) attributes {dimension_semantics = [#tpu.dimension_semantics<arbitrary>], iteration_bounds = array<i64: 4>, scalar_prefetch = 0 : i64, scratch_operands = 0 : i64, tpu.core_type = #tpu.core_type<tc>, window_params = [{transform_indices = @transform_0, window_bounds = array<i64: 2, 8, 512>}, {transform_indices = @transform_1, window_bounds = array<i64: 8, 512>}, {pipeline_mode = #tpu.pipeline_mode<synchronous>, transform_indices = @transform_2, window_bounds = array<i64: 2, 8, 8>}]} {
    %c0_i32 = arith.constant 0 : i32
    %0 = arith.cmpi eq, %arg0, %c0_i32 : i32
    %1 = arith.extui %0 : i1 to i32
    %c0_i32_0 = arith.constant 0 : i32
    %2 = arith.cmpi ne, %1, %c0_i32_0 : i32
    scf.if %2 {
      %cst_20 = arith.constant 0.000000e+00 : f32
      %22 = vector.broadcast %cst_20 : f32 to vector<2x8x8xf32>
      %c0_21 = arith.constant 0 : index
      %c0_22 = arith.constant 0 : index
      %c0_23 = arith.constant 0 : index
      %23 = vector.load %arg3[%c0_21, %c0_22, %c0_23] : memref<2x8x8xf32, #tpu.memory_space<vmem>>, vector<2x8x8xf32>
      tpu.vector_store %arg3[%c0_21, %c0_22, %c0_23], %22 {strides = array<i32>} : memref<2x8x8xf32, #tpu.memory_space<vmem>>, vector<2x8x8xf32>,
    } else {
    }
    %c0 = arith.constant 0 : index
    %c0_1 = arith.constant 0 : index
    %3 = vector.load %arg2[%c0, %c0_1] : memref<8x512xf32, #tpu.memory_space<vmem>>, vector<8x512xf32>
    %c0_2 = arith.constant 0 : index
    %c0_3 = arith.constant 0 : index
    %c0_4 = arith.constant 0 : index
    %4 = vector.load %arg3[%c0_2, %c0_3, %c0_4] : memref<2x8x8xf32, #tpu.memory_space<vmem>>, vector<1x8x8xf32>
    %5 = vector.shape_cast %4 : vector<1x8x8xf32> to vector<8x8xf32>
    %c0_5 = arith.constant 0 : index
    %c0_6 = arith.constant 0 : index
    %c0_7 = arith.constant 0 : index
    %6 = vector.load %arg1[%c0_5, %c0_6, %c0_7] : memref<2x8x512xf32, #tpu.memory_space<vmem>>, vector<1x8x512xf32>
    %7 = vector.shape_cast %6 : vector<1x8x512xf32> to vector<8x512xf32>
    %cst = arith.constant dense<0.000000e+00> : vector<8x8xf32>
    %8 = tpu.matmul %7, %3, %cst {dimension_numbers = #tpu.dot_dimension_numbers<[1], [1], [0], [0], [0, 0, 1, 0], [], []>, precision = #tpu.contract_precision<fp32>} : vector<8x512xf32>, vector<8x512xf32>, vector<8x8xf32> -> vector<8x8xf32>
    %9 = arith.addf %5, %8 : vector<8x8xf32>
    %c0_8 = arith.constant 0 : index
    %c0_9 = arith.constant 0 : index
    %c0_10 = arith.constant 0 : index
    %10 = vector.load %arg3[%c0_8, %c0_9, %c0_10] : memref<2x8x8xf32, #tpu.memory_space<vmem>>, vector<1x8x8xf32>
    %11 = vector.shape_cast %10 : vector<1x8x8xf32> to vector<8x8xf32>
    %12 = vector.shape_cast %9 : vector<8x8xf32> to vector<1x8x8xf32>
    tpu.vector_store %arg3[%c0_8, %c0_9, %c0_10], %12 {strides = array<i32>} : memref<2x8x8xf32, #tpu.memory_space<vmem>>, vector<1x8x8xf32>,
    %c1 = arith.constant 1 : index
    %c0_11 = arith.constant 0 : index
    %c0_12 = arith.constant 0 : index
    %13 = vector.load %arg3[%c1, %c0_11, %c0_12] : memref<2x8x8xf32, #tpu.memory_space<vmem>>, vector<1x8x8xf32>
    %14 = vector.shape_cast %13 : vector<1x8x8xf32> to vector<8x8xf32>
    %c1_13 = arith.constant 1 : index
    %c0_14 = arith.constant 0 : index
    %c0_15 = arith.constant 0 : index
    %15 = vector.load %arg1[%c1_13, %c0_14, %c0_15] : memref<2x8x512xf32, #tpu.memory_space<vmem>>, vector<1x8x512xf32>
    %16 = vector.shape_cast %15 : vector<1x8x512xf32> to vector<8x512xf32>
    %cst_16 = arith.constant dense<0.000000e+00> : vector<8x8xf32>
    %17 = tpu.matmul %16, %3, %cst_16 {dimension_numbers = #tpu.dot_dimension_numbers<[1], [1], [0], [0], [0, 0, 1, 0], [], []>, precision = #tpu.contract_precision<fp32>} : vector<8x512xf32>, vector<8x512xf32>, vector<8x8xf32> -> vector<8x8xf32>
    %18 = arith.addf %14, %17 : vector<8x8xf32>
    %c1_17 = arith.constant 1 : index
    %c0_18 = arith.constant 0 : index
    %c0_19 = arith.constant 0 : index
    %19 = vector.load %arg3[%c1_17, %c0_18, %c0_19] : memref<2x8x8xf32, #tpu.memory_space<vmem>>, vector<1x8x8xf32>
    %20 = vector.shape_cast %19 : vector<1x8x8xf32> to vector<8x8xf32>
    %21 = vector.shape_cast %18 : vector<8x8xf32> to vector<1x8x8xf32>
    tpu.vector_store %arg3[%c1_17, %c0_18, %c0_19], %21 {strides = array<i32>} : memref<2x8x8xf32, #tpu.memory_space<vmem>>, vector<1x8x8xf32>,
    return
  }
  func.func @transform_0(%arg0: i32) -> (i32, i32, i32) {
    %c0_i32 = arith.constant 0 : i32
    %c0_i32_0 = arith.constant 0 : i32
    %c0_i32_1 = arith.constant 0 : i32
    return %c0_i32, %c0_i32_0, %arg0 : i32, i32, i32
  }
  func.func @transform_1(%arg0: i32) -> (i32, i32) {
    %c0_i32 = arith.constant 0 : i32
    %c0_i32_0 = arith.constant 0 : i32
    return %c0_i32, %arg0 : i32, i32
  }
  func.func @transform_2(%arg0: i32) -> (i32, i32, i32) {
    %c0_i32 = arith.constant 0 : i32
    %c0_i32_0 = arith.constant 0 : i32
    %c0_i32_1 = arith.constant 0 : i32
    %c0_i32_2 = arith.constant 0 : i32
    return %c0_i32, %c0_i32_0, %c0_i32_1 : i32, i32, i32
  }
}

</mosaic_0001>

<llo_original>
// kernel: tpu_custom_call.1
$region0: #{tpu_custom_call.1}
  #allocation0 [shape = 'u32[]', space=smem, size = 0x4, offset = 0x4, fixed_abs, tag = 'smem constant byte address 0x4 - core index']
  #allocation1 [shape = 'u32[72,128]{1,0:T(1,128)}', space=vmem, size = 0x9000, scoped, tag = 'internal scratch']
  %s0 = inlined_call_operand.hbm [shape: f32[2,8,2048], index: 0, kind: input, shape index: {}]
  %s1 = inlined_call_operand.hbm [shape: f32[8,2048], index: 1, kind: input, shape index: {}]
  %s2 = inlined_call_operand.hbm [shape: f32[2,8,8], index: 2, kind: output, shape index: {}]
  %s3 = sld [smem:[#allocation0]]
  $region53: #{tpu_custom_call.1} parent=0
    _
  %s5 = ssub.s32 1, %s3
  %s6 = scalar_select 0, %s5, %s3
  $region1: #{tpu_custom_call.1} parent=0
    #allocation2 [shape = 'u8[65536]{0}', space=vmem, size = 0x10000, scoped, tag = 'input window, operand 0']
    #allocation3 [shape = 's32[2]{0}', space=sflag, size = 0x8, scoped, tag = 'scoped memory for tpu_custom_call.1']
    #allocation4 [shape = 's32[2]{0}', space=sflag, size = 0x8, scoped, tag = 'scoped memory for tpu_custom_call.1']
    #allocation5 [shape = 'u8[32768]{0}', space=vmem, size = 0x8000, scoped, tag = 'input window, operand 1']
    #allocation6 [shape = 's32[2]{0}', space=sflag, size = 0x8, scoped, tag = 'scoped memory for tpu_custom_call.1']
    #allocation7 [shape = 'u8[8192]{0}', space=vmem, size = 0x2000, scoped, tag = 'output window, operand 0, single buffered']
    %7 = vsyncpa [#allocation3], 0
    %s8 = scalar_lea.sflag [#allocation3], 1
    %9 = vsyncpa %s8, 0
    %10 = vsyncpa [#allocation6], 0
    %s11 = scalar_lea.sflag [#allocation6], 1
    %12 = vsyncpa %s11, 0
    %13 = vsyncpa [#allocation4], 0
    loop: start=0, step=1, limit=6
    $region2: #{tpu_custom_call.1} parent=1 // loop_pre_header
      _
    $region3: #{tpu_custom_call.1} parent=1 // loop_header
      %s15 = sphi 0, %s19
      %p16 = scmp.ge.s32.totalorder %s15, 6
      %s25 = sphi 0, %s27
      %s28 = sphi 0, %s25
      %s29 = sphi 0, %s28
      %s45 = sphi 0, %s29
      %s51 = sphi 0, %s53
      %s54 = sphi 0, %s51
      %s55 = sphi 0, %s54
      %s71 = sphi 0, %s55
      %s75 = sphi 0, %s75
      %s77 = sphi 0, %s75
      %s78 = sphi 0, %s77
      %s92 = sphi 0, %s78
    $region4: #{tpu_custom_call.1} parent=1 // loop_header_branch
      %18 = sbr.rel (%p16) target = $region8
    $region5: #{tpu_custom_call.1} parent=1 // loop_body
      %s20 = ssub.s32 %s15, 1
      %s21 = ssub.s32 %s15, 2
      %s22 = sadd.s32 %s15, 1
      %s23 = ssub.s32 %s15, %s22
      %p24 = scmp.eq.s32.totalorder %s23, 0
      %s26 = sadd.s32 %s25, 1
      %s27 = scalar_select %p24, %s25, %s26
      %p30 = pneg %p24
      %p31 = scmp.eq.s32.totalorder %s15, 3
      %p32 = por %p30, %p31
      %p33 = scmp.ne.s32.totalorder %s25, %s28
      %p34 = scmp.eq.s32.totalorder %s15, 0
      %p35 = por %p33, %p34
      %p36 = scmp.ne.s32.totalorder %s25, %s28
      %p37 = scmp.eq.s32.totalorder %s20, 3
      %p38 = por %p36, %p37
      %p39 = scmp.ne.s32.totalorder %s28, %s29
      %p40 = scmp.eq.s32.totalorder %s20, 0
      %p41 = por %p39, %p40
      %p42 = scmp.ne.s32.totalorder %s28, %s29
      %p43 = scmp.eq.s32.totalorder %s21, 3
      %p44 = por %p42, %p43
      %p46 = scmp.ne.s32.totalorder %s29, %s45
      %p47 = scmp.eq.s32.totalorder %s21, 0
      %p48 = por %p46, %p47
      %s49 = ssub.s32 %s15, %s22
      %p50 = scmp.eq.s32.totalorder %s49, 0
      %s52 = sadd.s32 %s51, 1
      %s53 = scalar_select %p50, %s51, %s52
      %p56 = pneg %p50
      %p57 = scmp.eq.s32.totalorder %s15, 3
      %p58 = por %p56, %p57
      %p59 = scmp.ne.s32.totalorder %s51, %s54
      %p60 = scmp.eq.s32.totalorder %s15, 0
      %p61 = por %p59, %p60
      %p62 = scmp.ne.s32.totalorder %s51, %s54
      %p63 = scmp.eq.s32.totalorder %s20, 3
      %p64 = por %p62, %p63
      %p65 = scmp.ne.s32.totalorder %s54, %s55
      %p66 = scmp.eq.s32.totalorder %s20, 0
      %p67 = por %p65, %p66
      %p68 = scmp.ne.s32.totalorder %s54, %s55
      %p69 = scmp.eq.s32.totalorder %s21, 3
      %p70 = por %p68, %p69
      %p72 = scmp.ne.s32.totalorder %s55, %s71
      %p73 = scmp.eq.s32.totalorder %s21, 0
      %p74 = por %p72, %p73
      %s76 = sadd.s32 %s75, 1
      %p79 = scmp.eq.s32.totalorder %s15, 3
      %p80 = scmp.ne.s32.totalorder %s75, %s77
      %p81 = scmp.eq.s32.totalorder %s15, 0
      %p82 = por %p80, %p81
      %p83 = scmp.ne.s32.totalorder %s75, %s77
      %p84 = scmp.eq.s32.totalorder %s20, 3
      %p85 = por %p83, %p84
      %p86 = scmp.ne.s32.totalorder %s77, %s78
      %p87 = scmp.eq.s32.totalorder %s20, 0
      %p88 = por %p86, %p87
      %p89 = scmp.ne.s32.totalorder %s77, %s78
      %p90 = scmp.eq.s32.totalorder %s21, 3
      %p91 = por %p89, %p90
      %p93 = scmp.ne.s32.totalorder %s78, %s92
      %p94 = scmp.eq.s32.totalorder %s21, 0
      %p95 = por %p93, %p94
      %p96 = scmp.le.s32.totalorder 1, %s15
      %p97 = scmp.lt.s32.totalorder %s15, 5
      %p98 = pnand %p96, %p97
      %p99 = pneg %p98
      // Predicated region
      $region9: #{tpu_custom_call.1} parent=5 // pred_check
        _
      $region10: #{tpu_custom_call.1} parent=5 // pred_check_branch
        %101 = sbr.rel (%p98) target = $region12
      $region11: #{tpu_custom_call.1} parent=5 // pred_region
        %s102 = ssub.s32 %s15, 1
      $region12: #{tpu_custom_call.1} parent=5 // pred_fallthru
        _
      %p103 = scmp.lt.s32.totalorder %s15, 4
      // Predicated region
      $region13: #{tpu_custom_call.1} parent=5 // pred_check
        %p104 = pneg %p103
      $region14: #{tpu_custom_call.1} parent=5 // pred_check_branch
        %106 = sbr.rel (%p104) target = $region16
      $region15: #{tpu_custom_call.1} parent=5 // pred_region
        // Predicated region
        $region17: #{tpu_custom_call.1} parent=15 // pred_check
          %p107 = pneg %p35
        $region18: #{tpu_custom_call.1} parent=15 // pred_check_branch
          %109 = sbr.rel (%p107) target = $region20
        $region19: #{tpu_custom_call.1} parent=15 // pred_region
          %s110 = sand.u32 %s25, 1
          %s111 = scalar_lea.sflag [#allocation3], %s110
          %s112 = sand.u32 %s25, 1
          %s113 = smul.addr %s112, 64
          %s114 = scalar_lea.vmem [#allocation2], %s113
          %s115 = smul.u32 4, %s15
          %117 = vsyncadd %s111, 0
          %s118 = smul.addr %s115, 8
          %s119 = scalar_lea.hbm %s0, %s118
          %s120 = sshll.u32 %s119, 4
          %s121 = int_to_ptr.hbm [resolvable:$true] %s120
          %s122 = sshll.u32 %s114, 4
          %s123 = int_to_ptr.vmem [resolvable:$true] %s122
          %128 = dma.hbm_to_vmem [thread:$0]  %s121, 1024, %s123, %s111, 2048, 512, 32
        $region20: #{tpu_custom_call.1} parent=15 // pred_fallthru
          _
        // Predicated region
        $region21: #{tpu_custom_call.1} parent=15 // pred_check
          %p129 = pneg %p61
        $region22: #{tpu_custom_call.1} parent=15 // pred_check_branch
          %131 = sbr.rel (%p129) target = $region24
        $region23: #{tpu_custom_call.1} parent=15 // pred_region
          %s132 = sand.u32 %s51, 1
          %s133 = scalar_lea.sflag [#allocation6], %s132
          %s134 = sand.u32 %s51, 1
          %s135 = smul.addr %s134, 32
          %s136 = scalar_lea.vmem [#allocation5], %s135
          %s137 = smul.u32 4, %s15
          %139 = vsyncadd %s133, 0
          %s140 = smul.addr %s137, 8
          %s141 = scalar_lea.hbm %s1, %s140
          %s143 = sshll.u32 %s141, 4
          %s144 = int_to_ptr.hbm [resolvable:$true] %s143
          %s145 = sshll.u32 %s136, 4
          %s146 = int_to_ptr.vmem [resolvable:$true] %s145
          %148 = dma.hbm_to_vmem [thread:$0]  %s144, 512, %s146, %s133
        $region24: #{tpu_custom_call.1} parent=15 // pred_fallthru
          _
      $region16: #{tpu_custom_call.1} parent=5 // pred_fallthru
        _
      %p149 = scmp.le.s32.totalorder 1, %s15
      %p150 = scmp.lt.s32.totalorder %s15, 5
      %p151 = pnand %p149, %p150
      %p152 = pneg %p151
      // Predicated region
      $region25: #{tpu_custom_call.1} parent=5 // pred_check
        _
      $region26: #{tpu_custom_call.1} parent=5 // pred_check_branch
        %154 = sbr.rel (%p151) target = $region28
      $region27: #{tpu_custom_call.1} parent=5 // pred_region
        %s155 = ssub.s32 %s15, 1
        %s156 = sand.u32 %s28, 1
        %s157 = scalar_lea.sflag [#allocation3], %s156
        %s158 = sand.u32 %s28, 1
        %s159 = smul.addr %s158, 64
        %s160 = scalar_lea.vmem [#allocation2], %s159
        // Predicated region
        $region29: #{tpu_custom_call.1} parent=27 // pred_check
          %p161 = pneg %p41
        $region30: #{tpu_custom_call.1} parent=27 // pred_check_branch
          %163 = sbr.rel (%p161) target = $region32
        $region31: #{tpu_custom_call.1} parent=27 // pred_region
          %165 = dma.done %s157, 1024
        $region32: #{tpu_custom_call.1} parent=27 // pred_fallthru
          _
        %s166 = sand.u32 %s54, 1
        %s167 = scalar_lea.sflag [#allocation6], %s166
        %s168 = sand.u32 %s54, 1
        %s169 = smul.addr %s168, 32
        %s170 = scalar_lea.vmem [#allocation5], %s169
        // Predicated region
        $region33: #{tpu_custom_call.1} parent=27 // pred_check
          %p171 = pneg %p67
        $region34: #{tpu_custom_call.1} parent=27 // pred_check_branch
          %173 = sbr.rel (%p171) target = $region36
        $region35: #{tpu_custom_call.1} parent=27 // pred_region
          %175 = dma.done %s167, 512
        $region36: #{tpu_custom_call.1} parent=27 // pred_fallthru
          _
        %s176 = sand.u32 %s28, 1
        %s177 = scalar_lea.sflag [#allocation3], %s176
        %s178 = sand.u32 %s28, 1
        %s179 = smul.addr %s178, 64
        %s180 = scalar_lea.vmem [#allocation2], %s179
        %p181 = pneg %p41
        %p182 = pneg %p38
        %s183 = sand.u32 %s54, 1
        %s184 = scalar_lea.sflag [#allocation6], %s183
        %s185 = sand.u32 %s54, 1
        %s186 = smul.addr %s185, 32
        %s187 = scalar_lea.vmem [#allocation5], %s186
        %p188 = pneg %p67
        %p189 = pneg %p64
        %p190 = pneg %p88
        %p191 = pneg %p85
        %s192 = smul.u32 4, %s20
        %s193 = smul.u32 4, %s20
        %p194 = scmp.eq.s32.totalorder %s20, 0
        // Predicated region
        $region37: #{tpu_custom_call.1} parent=27 // pred_check
          %p195 = pneg %p194
        $region38: #{tpu_custom_call.1} parent=27 // pred_check_branch
          %197 = sbr.rel (%p195) target = $region40
        $region39: #{tpu_custom_call.1} parent=27 // pred_region
          %vm198 = vcmask 64512
          %199 = vst.msk [vmem:[#allocation7] sm:$0xff] %vm198, 0.0
          %200 = vst.msk [vmem:[#allocation7 + $0x8] sm:$0xff] %vm198, 0.0
        $region40: #{tpu_custom_call.1} parent=27 // pred_fallthru
          _
        %v201 = vld [vmem:[%s170] sm:$0xff]
        %v202 = vld [vmem:[%s170 + $0x8] sm:$0xff]
        %v203 = vld [vmem:[%s170 + $0x10] sm:$0xff]
        %v204 = vld [vmem:[%s170 + $0x18] sm:$0xff]
        %v205 = vld [vmem:[#allocation7] sm:$0xff]
        %v206 = vld [vmem:[%s160] sm:$0xff]
        %v207 = vld [vmem:[%s160 + $0x8] sm:$0xff]
        %v208 = vld [vmem:[%s160 + $0x10] sm:$0xff]
        %v209 = vld [vmem:[%s160 + $0x18] sm:$0xff]
        %210 = vmatpush.xpose.msra.mxu0 0.0
        %211 = vmatpush.xpose.msra.mxu0 0.0
        %212 = vmatpush.xpose.msra.mxu0 0.0
        %213 = vmatpush.xpose.msra.mxu0 0.0
        %214 = vmatpush.xpose.msra.mxu0 0.0
        %215 = vmatpush.xpose.msra.mxu0 0.0
        %216 = vmatpush.xpose.msra.mxu0 0.0
        %217 = vmatpush.xpose.msra.mxu0 0.0
        %218 = vmatpush.xpose.msra.mxu0 0.0
        %219 = vmatpush.xpose.msra.mxu0 0.0
        %220 = vmatpush.xpose.msra.mxu0 0.0
        %221 = vmatpush.xpose.msra.mxu0 0.0
        %222 = vmatpush.xpose.msra.mxu0 0.0
        %223 = vmatpush.xpose.msra.mxu0 0.0
        %224 = vmatpush.xpose.msra.mxu0 0.0
        %v225 = vand.u32 %v201, 4294901760
        %226 = vmatpush.xpose.msra.mxu0 %v225
        %v227 = vand.u32 %v206, 4294901760
        %v228 = vsub.f32 %v206, %v227
        %v229 = vand.u32 %v228, 4294901760
        %v230 = vsub.f32 %v228, %v229
        %v231 = vand.u32 %v230, 4294901760
        %232 = vmatmul.f32.gmra.mxu0 %v231
        %v233 = vpop.f32.mrf.mxu0
        %v234 = vadd.f32 0.0, %v233
        %235 = vdwg.mxu0
        %236 = vmatpush.xpose.msra.mxu0 0.0
        %237 = vmatpush.xpose.msra.mxu0 0.0
        %238 = vmatpush.xpose.msra.mxu0 0.0
        %239 = vmatpush.xpose.msra.mxu0 0.0
        %240 = vmatpush.xpose.msra.mxu0 0.0
        %241 = vmatpush.xpose.msra.mxu0 0.0
        %242 = vmatpush.xpose.msra.mxu0 0.0
        %243 = vmatpush.xpose.msra.mxu0 0.0
        %244 = vmatpush.xpose.msra.mxu0 0.0
        %245 = vmatpush.xpose.msra.mxu0 0.0
        %246 = vmatpush.xpose.msra.mxu0 0.0
        %247 = vmatpush.xpose.msra.mxu0 0.0
        %248 = vmatpush.xpose.msra.mxu0 0.0
        %249 = vmatpush.xpose.msra.mxu0 0.0
        %250 = vmatpush.xpose.msra.mxu0 0.0
        %v251 = vand.u32 %v201, 4294901760
        %v252 = vsub.f32 %v201, %v251
        %v253 = vand.u32 %v252, 4294901760
        %v254 = vsub.f32 %v252, %v253
        %v255 = vand.u32 %v254, 4294901760
        %256 = vmatpush.xpose.msra.mxu0 %v255
        %v257 = vand.u32 %v206, 4294901760
        %258 = vmatmul.f32.gmra.mxu0 %v257
        %v259 = vpop.f32.mrf.mxu0
        %v260 = vadd.f32 %v234, %v259
        %261 = vdwg.mxu0
        %262 = vmatpush.xpose.msra.mxu0 0.0
        %263 = vmatpush.xpose.msra.mxu0 0.0
        %264 = vmatpush.xpose.msra.mxu0 0.0
        %265 = vmatpush.xpose.msra.mxu0 0.0
        %266 = vmatpush.xpose.msra.mxu0 0.0
        %267 = vmatpush.xpose.msra.mxu0 0.0
        %268 = vmatpush.xpose.msra.mxu0 0.0
        %269 = vmatpush.xpose.msra.mxu0 0.0
        %270 = vmatpush.xpose.msra.mxu0 0.0
        %271 = vmatpush.xpose.msra.mxu0 0.0
        %272 = vmatpush.xpose.msra.mxu0 0.0
        %273 = vmatpush.xpose.msra.mxu0 0.0
        %274 = vmatpush.xpose.msra.mxu0 0.0
        %275 = vmatpush.xpose.msra.mxu0 0.0
        %276 = vmatpush.xpose.msra.mxu0 0.0
        %v277 = vand.u32 %v201, 4294901760
        %v278 = vsub.f32 %v201, %v277
        %279 = vmatpush.xpose.msra.mxu0 %v278
        %v280 = vand.u32 %v206, 4294901760
        %v281 = vsub.f32 %v206, %v280
        %282 = vmatmul.f32.gmra.mxu0 %v281
        %v283 = vpop.f32.mrf.mxu0
        %v284 = vadd.f32 %v260, %v283
        %285 = vdwg.mxu0
        %286 = vmatpush.xpose.msra.mxu0 0.0
        %287 = vmatpush.xpose.msra.mxu0 0.0
        %288 = vmatpush.xpose.msra.mxu0 0.0
        %289 = vmatpush.xpose.msra.mxu0 0.0
        %290 = vmatpush.xpose.msra.mxu0 0.0
        %291 = vmatpush.xpose.msra.mxu0 0.0
        %292 = vmatpush.xpose.msra.mxu0 0.0
        %293 = vmatpush.xpose.msra.mxu0 0.0
        %294 = vmatpush.xpose.msra.mxu0 0.0
        %295 = vmatpush.xpose.msra.mxu0 0.0
        %296 = vmatpush.xpose.msra.mxu0 0.0
        %297 = vmatpush.xpose.msra.mxu0 0.0
        %298 = vmatpush.xpose.msra.mxu0 0.0
        %299 = vmatpush.xpose.msra.mxu0 0.0
        %300 = vmatpush.xpose.msra.mxu0 0.0
        %v301 = vand.u32 %v201, 4294901760
        %302 = vmatpush.xpose.msra.mxu0 %v301
        %v303 = vand.u32 %v206, 4294901760
        %v304 = vsub.f32 %v206, %v303
        %v305 = vand.u32 %v304, 4294901760
        %306 = vmatmul.f32.gmra.mxu0 %v305
        %v307 = vpop.f32.mrf.mxu0
        %v308 = vadd.f32 %v284, %v307
        %309 = vdwg.mxu0
        %310 = vmatpush.xpose.msra.mxu0 0.0
        %311 = vmatpush.xpose.msra.mxu0 0.0
        %312 = vmatpush.xpose.msra.mxu0 0.0
        %313 = vmatpush.xpose.msra.mxu0 0.0
        %314 = vmatpush.xpose.msra.mxu0 0.0
        %315 = vmatpush.xpose.msra.mxu0 0.0
        %316 = vmatpush.xpose.msra.mxu0 0.0
        %317 = vmatpush.xpose.msra.mxu0 0.0
        %318 = vmatpush.xpose.msra.mxu0 0.0
        %319 = vmatpush.xpose.msra.mxu0 0.0
        %320 = vmatpush.xpose.msra.mxu0 0.0
        %321 = vmatpush.xpose.msra.mxu0 0.0
        %322 = vmatpush.xpose.msra.mxu0 0.0
        %323 = vmatpush.xpose.msra.mxu0 0.0
        %324 = vmatpush.xpose.msra.mxu0 0.0
        %v325 = vand.u32 %v201, 4294901760
        %v326 = vsub.f32 %v201, %v325
        %v327 = vand.u32 %v326, 4294901760
        %328 = vmatpush.xpose.msra.mxu0 %v327
        %v329 = vand.u32 %v206, 4294901760
        %330 = vmatmul.f32.gmra.mxu0 %v329
        %v331 = vpop.f32.mrf.mxu0
        %v332 = vadd.f32 %v308, %v331
        %333 = vdwg.mxu0
        %334 = vmatpush.xpose.msra.mxu0 0.0
        %335 = vmatpush.xpose.msra.mxu0 0.0
        %336 = vmatpush.xpose.msra.mxu0 0.0
        %337 = vmatpush.xpose.msra.mxu0 0.0
        %338 = vmatpush.xpose.msra.mxu0 0.0
        %339 = vmatpush.xpose.msra.mxu0 0.0
        %340 = vmatpush.xpose.msra.mxu0 0.0
        %341 = vmatpush.xpose.msra.mxu0 0.0
        %342 = vmatpush.xpose.msra.mxu0 0.0
        %343 = vmatpush.xpose.msra.mxu0 0.0
        %344 = vmatpush.xpose.msra.mxu0 0.0
        %345 = vmatpush.xpose.msra.mxu0 0.0
        %346 = vmatpush.xpose.msra.mxu0 0.0
        %347 = vmatpush.xpose.msra.mxu0 0.0
        %348 = vmatpush.xpose.msra.mxu0 0.0
        %v349 = vand.u32 %v201, 4294901760
        %350 = vmatpush.xpose.msra.mxu0 %v349
        %v351 = vand.u32 %v206, 4294901760
        %352 = vmatmul.f32.gmra.mxu0 %v351
        %v353 = vpop.f32.mrf.mxu0
        %v354 = vadd.f32 %v332, %v353
        %355 = vdwg.mxu0
        %356 = vmatpush.xpose.msra.mxu0 0.0
        %357 = vmatpush.xpose.msra.mxu0 0.0
        %358 = vmatpush.xpose.msra.mxu0 0.0
        %359 = vmatpush.xpose.msra.mxu0 0.0
        %360 = vmatpush.xpose.msra.mxu0 0.0
        %361 = vmatpush.xpose.msra.mxu0 0.0
        %362 = vmatpush.xpose.msra.mxu0 0.0
        %363 = vmatpush.xpose.msra.mxu0 0.0
        %364 = vmatpush.xpose.msra.mxu0 0.0
        %365 = vmatpush.xpose.msra.mxu0 0.0
        %366 = vmatpush.xpose.msra.mxu0 0.0
        %367 = vmatpush.xpose.msra.mxu0 0.0
        %368 = vmatpush.xpose.msra.mxu0 0.0
        %369 = vmatpush.xpose.msra.mxu0 0.0
        %370 = vmatpush.xpose.msra.mxu0 0.0
        %v371 = vand.u32 %v202, 4294901760
        %372 = vmatpush.xpose.msra.mxu0 %v371
        %v373 = vand.u32 %v207, 4294901760
        %v374 = vsub.f32 %v207, %v373
        %v375 = vand.u32 %v374, 4294901760
        %v376 = vsub.f32 %v374, %v375
        %v377 = vand.u32 %v376, 4294901760
        %378 = vmatmul.f32.gmra.mxu0 %v377
        %v379 = vpop.f32.mrf.mxu0
        %v380 = vadd.f32 %v354, %v379
        %381 = vdwg.mxu0
        %382 = vmatpush.xpose.msra.mxu0 0.0
        %383 = vmatpush.xpose.msra.mxu0 0.0
        %384 = vmatpush.xpose.msra.mxu0 0.0
        %385 = vmatpush.xpose.msra.mxu0 0.0
        %386 = vmatpush.xpose.msra.mxu0 0.0
        %387 = vmatpush.xpose.msra.mxu0 0.0
        %388 = vmatpush.xpose.msra.mxu0 0.0
        %389 = vmatpush.xpose.msra.mxu0 0.0
        %390 = vmatpush.xpose.msra.mxu0 0.0
        %391 = vmatpush.xpose.msra.mxu0 0.0
        %392 = vmatpush.xpose.msra.mxu0 0.0
        %393 = vmatpush.xpose.msra.mxu0 0.0
        %394 = vmatpush.xpose.msra.mxu0 0.0
        %395 = vmatpush.xpose.msra.mxu0 0.0
        %396 = vmatpush.xpose.msra.mxu0 0.0
        %v397 = vand.u32 %v202, 4294901760
        %v398 = vsub.f32 %v202, %v397
        %v399 = vand.u32 %v398, 4294901760
        %v400 = vsub.f32 %v398, %v399
        %v401 = vand.u32 %v400, 4294901760
        %402 = vmatpush.xpose.msra.mxu0 %v401
        %v403 = vand.u32 %v207, 4294901760
        %404 = vmatmul.f32.gmra.mxu0 %v403
        %v405 = vpop.f32.mrf.mxu0
        %v406 = vadd.f32 %v380, %v405
        %407 = vdwg.mxu0
        %408 = vmatpush.xpose.msra.mxu0 0.0
        %409 = vmatpush.xpose.msra.mxu0 0.0
        %410 = vmatpush.xpose.msra.mxu0 0.0
        %411 = vmatpush.xpose.msra.mxu0 0.0
        %412 = vmatpush.xpose.msra.mxu0 0.0
        %413 = vmatpush.xpose.msra.mxu0 0.0
        %414 = vmatpush.xpose.msra.mxu0 0.0
        %415 = vmatpush.xpose.msra.mxu0 0.0
        %416 = vmatpush.xpose.msra.mxu0 0.0
        %417 = vmatpush.xpose.msra.mxu0 0.0
        %418 = vmatpush.xpose.msra.mxu0 0.0
        %419 = vmatpush.xpose.msra.mxu0 0.0
        %420 = vmatpush.xpose.msra.mxu0 0.0
        %421 = vmatpush.xpose.msra.mxu0 0.0
        %422 = vmatpush.xpose.msra.mxu0 0.0
        %v423 = vand.u32 %v202, 4294901760
        %v424 = vsub.f32 %v202, %v423
        %425 = vmatpush.xpose.msra.mxu0 %v424
        %v426 = vand.u32 %v207, 4294901760
        %v427 = vsub.f32 %v207, %v426
        %428 = vmatmul.f32.gmra.mxu0 %v427
        %v429 = vpop.f32.mrf.mxu0
        %v430 = vadd.f32 %v406, %v429
        %431 = vdwg.mxu0
        %432 = vmatpush.xpose.msra.mxu0 0.0
        %433 = vmatpush.xpose.msra.mxu0 0.0
        %434 = vmatpush.xpose.msra.mxu0 0.0
        %435 = vmatpush.xpose.msra.mxu0 0.0
        %436 = vmatpush.xpose.msra.mxu0 0.0
        %437 = vmatpush.xpose.msra.mxu0 0.0
        %438 = vmatpush.xpose.msra.mxu0 0.0
        %439 = vmatpush.xpose.msra.mxu0 0.0
        %440 = vmatpush.xpose.msra.mxu0 0.0
        %441 = vmatpush.xpose.msra.mxu0 0.0
        %442 = vmatpush.xpose.msra.mxu0 0.0
        %443 = vmatpush.xpose.msra.mxu0 0.0
        %444 = vmatpush.xpose.msra.mxu0 0.0
        %445 = vmatpush.xpose.msra.mxu0 0.0
        %446 = vmatpush.xpose.msra.mxu0 0.0
        %v447 = vand.u32 %v202, 4294901760
        %448 = vmatpush.xpose.msra.mxu0 %v447
        %v449 = vand.u32 %v207, 4294901760
        %v450 = vsub.f32 %v207, %v449
        %v451 = vand.u32 %v450, 4294901760
        %452 = vmatmul.f32.gmra.mxu0 %v451
        %v453 = vpop.f32.mrf.mxu0
        %v454 = vadd.f32 %v430, %v453
        %455 = vdwg.mxu0
        %456 = vmatpush.xpose.msra.mxu0 0.0
        %457 = vmatpush.xpose.msra.mxu0 0.0
        %458 = vmatpush.xpose.msra.mxu0 0.0
        %459 = vmatpush.xpose.msra.mxu0 0.0
        %460 = vmatpush.xpose.msra.mxu0 0.0
        %461 = vmatpush.xpose.msra.mxu0 0.0
        %462 = vmatpush.xpose.msra.mxu0 0.0
        %463 = vmatpush.xpose.msra.mxu0 0.0
        %464 = vmatpush.xpose.msra.mxu0 0.0
        %465 = vmatpush.xpose.msra.mxu0 0.0
        %466 = vmatpush.xpose.msra.mxu0 0.0
        %467 = vmatpush.xpose.msra.mxu0 0.0
        %468 = vmatpush.xpose.msra.mxu0 0.0
        %469 = vmatpush.xpose.msra.mxu0 0.0
        %470 = vmatpush.xpose.msra.mxu0 0.0
        %v471 = vand.u32 %v202, 4294901760
        %v472 = vsub.f32 %v202, %v471
        %v473 = vand.u32 %v472, 4294901760
        %474 = vmatpush.xpose.msra.mxu0 %v473
        %v475 = vand.u32 %v207, 4294901760
        %476 = vmatmul.f32.gmra.mxu0 %v475
        %v477 = vpop.f32.mrf.mxu0
        %v478 = vadd.f32 %v454, %v477
        %479 = vdwg.mxu0
        %480 = vmatpush.xpose.msra.mxu0 0.0
        %481 = vmatpush.xpose.msra.mxu0 0.0
        %482 = vmatpush.xpose.msra.mxu0 0.0
        %483 = vmatpush.xpose.msra.mxu0 0.0
        %484 = vmatpush.xpose.msra.mxu0 0.0
        %485 = vmatpush.xpose.msra.mxu0 0.0
        %486 = vmatpush.xpose.msra.mxu0 0.0
        %487 = vmatpush.xpose.msra.mxu0 0.0
        %488 = vmatpush.xpose.msra.mxu0 0.0
        %489 = vmatpush.xpose.msra.mxu0 0.0
        %490 = vmatpush.xpose.msra.mxu0 0.0
        %491 = vmatpush.xpose.msra.mxu0 0.0
        %492 = vmatpush.xpose.msra.mxu0 0.0
        %493 = vmatpush.xpose.msra.mxu0 0.0
        %494 = vmatpush.xpose.msra.mxu0 0.0
        %v495 = vand.u32 %v202, 4294901760
        %496 = vmatpush.xpose.msra.mxu0 %v495
        %v497 = vand.u32 %v207, 4294901760
        %498 = vmatmul.f32.gmra.mxu0 %v497
        %v499 = vpop.f32.mrf.mxu0
        %v500 = vadd.f32 %v478, %v499
        %501 = vdwg.mxu0
        %502 = vmatpush.xpose.msra.mxu0 0.0
        %503 = vmatpush.xpose.msra.mxu0 0.0
        %504 = vmatpush.xpose.msra.mxu0 0.0
        %505 = vmatpush.xpose.msra.mxu0 0.0
        %506 = vmatpush.xpose.msra.mxu0 0.0
        %507 = vmatpush.xpose.msra.mxu0 0.0
        %508 = vmatpush.xpose.msra.mxu0 0.0
        %509 = vmatpush.xpose.msra.mxu0 0.0
        %510 = vmatpush.xpose.msra.mxu0 0.0
        %511 = vmatpush.xpose.msra.mxu0 0.0
        %512 = vmatpush.xpose.msra.mxu0 0.0
        %513 = vmatpush.xpose.msra.mxu0 0.0
        %514 = vmatpush.xpose.msra.mxu0 0.0
        %515 = vmatpush.xpose.msra.mxu0 0.0
        %516 = vmatpush.xpose.msra.mxu0 0.0
        %v517 = vand.u32 %v203, 4294901760
        %518 = vmatpush.xpose.msra.mxu0 %v517
        %v519 = vand.u32 %v208, 4294901760
        %v520 = vsub.f32 %v208, %v519
        %v521 = vand.u32 %v520, 4294901760
        %v522 = vsub.f32 %v520, %v521
        %v523 = vand.u32 %v522, 4294901760
        %524 = vmatmul.f32.gmra.mxu0 %v523
        %v525 = vpop.f32.mrf.mxu0
        %v526 = vadd.f32 %v500, %v525
        %527 = vdwg.mxu0
        %528 = vmatpush.xpose.msra.mxu0 0.0
        %529 = vmatpush.xpose.msra.mxu0 0.0
        %530 = vmatpush.xpose.msra.mxu0 0.0
        %531 = vmatpush.xpose.msra.mxu0 0.0
        %532 = vmatpush.xpose.msra.mxu0 0.0
        %533 = vmatpush.xpose.msra.mxu0 0.0
        %534 = vmatpush.xpose.msra.mxu0 0.0
        %535 = vmatpush.xpose.msra.mxu0 0.0
        %536 = vmatpush.xpose.msra.mxu0 0.0
        %537 = vmatpush.xpose.msra.mxu0 0.0
        %538 = vmatpush.xpose.msra.mxu0 0.0
        %539 = vmatpush.xpose.msra.mxu0 0.0
        %540 = vmatpush.xpose.msra.mxu0 0.0
        %541 = vmatpush.xpose.msra.mxu0 0.0
        %542 = vmatpush.xpose.msra.mxu0 0.0
        %v543 = vand.u32 %v203, 4294901760
        %v544 = vsub.f32 %v203, %v543
        %v545 = vand.u32 %v544, 4294901760
        %v546 = vsub.f32 %v544, %v545
        %v547 = vand.u32 %v546, 4294901760
        %548 = vmatpush.xpose.msra.mxu0 %v547
        %v549 = vand.u32 %v208, 4294901760
        %550 = vmatmul.f32.gmra.mxu0 %v549
        %v551 = vpop.f32.mrf.mxu0
        %v552 = vadd.f32 %v526, %v551
        %553 = vdwg.mxu0
        %554 = vmatpush.xpose.msra.mxu0 0.0
        %555 = vmatpush.xpose.msra.mxu0 0.0
        %556 = vmatpush.xpose.msra.mxu0 0.0
        %557 = vmatpush.xpose.msra.mxu0 0.0
        %558 = vmatpush.xpose.msra.mxu0 0.0
        %559 = vmatpush.xpose.msra.mxu0 0.0
        %560 = vmatpush.xpose.msra.mxu0 0.0
        %561 = vmatpush.xpose.msra.mxu0 0.0
        %562 = vmatpush.xpose.msra.mxu0 0.0
        %563 = vmatpush.xpose.msra.mxu0 0.0
        %564 = vmatpush.xpose.msra.mxu0 0.0
        %565 = vmatpush.xpose.msra.mxu0 0.0
        %566 = vmatpush.xpose.msra.mxu0 0.0
        %567 = vmatpush.xpose.msra.mxu0 0.0
        %568 = vmatpush.xpose.msra.mxu0 0.0
        %v569 = vand.u32 %v203, 4294901760
        %v570 = vsub.f32 %v203, %v569
        %571 = vmatpush.xpose.msra.mxu0 %v570
        %v572 = vand.u32 %v208, 4294901760
        %v573 = vsub.f32 %v208, %v572
        %574 = vmatmul.f32.gmra.mxu0 %v573
        %v575 = vpop.f32.mrf.mxu0
        %v576 = vadd.f32 %v552, %v575
        %577 = vdwg.mxu0
        %578 = vmatpush.xpose.msra.mxu0 0.0
        %579 = vmatpush.xpose.msra.mxu0 0.0
        %580 = vmatpush.xpose.msra.mxu0 0.0
        %581 = vmatpush.xpose.msra.mxu0 0.0
        %582 = vmatpush.xpose.msra.mxu0 0.0
        %583 = vmatpush.xpose.msra.mxu0 0.0
        %584 = vmatpush.xpose.msra.mxu0 0.0
        %585 = vmatpush.xpose.msra.mxu0 0.0
        %586 = vmatpush.xpose.msra.mxu0 0.0
        %587 = vmatpush.xpose.msra.mxu0 0.0
        %588 = vmatpush.xpose.msra.mxu0 0.0
        %589 = vmatpush.xpose.msra.mxu0 0.0
        %590 = vmatpush.xpose.msra.mxu0 0.0
        %591 = vmatpush.xpose.msra.mxu0 0.0
        %592 = vmatpush.xpose.msra.mxu0 0.0
        %v593 = vand.u32 %v203, 4294901760
        %594 = vmatpush.xpose.msra.mxu0 %v593
        %v595 = vand.u32 %v208, 4294901760
        %v596 = vsub.f32 %v208, %v595
        %v597 = vand.u32 %v596, 4294901760
        %598 = vmatmul.f32.gmra.mxu0 %v597
        %v599 = vpop.f32.mrf.mxu0
        %v600 = vadd.f32 %v576, %v599
        %601 = vdwg.mxu0
        %602 = vmatpush.xpose.msra.mxu0 0.0
        %603 = vmatpush.xpose.msra.mxu0 0.0
        %604 = vmatpush.xpose.msra.mxu0 0.0
        %605 = vmatpush.xpose.msra.mxu0 0.0
        %606 = vmatpush.xpose.msra.mxu0 0.0
        %607 = vmatpush.xpose.msra.mxu0 0.0
        %608 = vmatpush.xpose.msra.mxu0 0.0
        %609 = vmatpush.xpose.msra.mxu0 0.0
        %610 = vmatpush.xpose.msra.mxu0 0.0
        %611 = vmatpush.xpose.msra.mxu0 0.0
        %612 = vmatpush.xpose.msra.mxu0 0.0
        %613 = vmatpush.xpose.msra.mxu0 0.0
        %614 = vmatpush.xpose.msra.mxu0 0.0
        %615 = vmatpush.xpose.msra.mxu0 0.0
        %616 = vmatpush.xpose.msra.mxu0 0.0
        %v617 = vand.u32 %v203, 4294901760
        %v618 = vsub.f32 %v203, %v617
        %v619 = vand.u32 %v618, 4294901760
        %620 = vmatpush.xpose.msra.mxu0 %v619
        %v621 = vand.u32 %v208, 4294901760
        %622 = vmatmul.f32.gmra.mxu0 %v621
        %v623 = vpop.f32.mrf.mxu0
        %v624 = vadd.f32 %v600, %v623
        %625 = vdwg.mxu0
        %626 = vmatpush.xpose.msra.mxu0 0.0
        %627 = vmatpush.xpose.msra.mxu0 0.0
        %628 = vmatpush.xpose.msra.mxu0 0.0
        %629 = vmatpush.xpose.msra.mxu0 0.0
        %630 = vmatpush.xpose.msra.mxu0 0.0
        %631 = vmatpush.xpose.msra.mxu0 0.0
        %632 = vmatpush.xpose.msra.mxu0 0.0
        %633 = vmatpush.xpose.msra.mxu0 0.0
        %634 = vmatpush.xpose.msra.mxu0 0.0
        %635 = vmatpush.xpose.msra.mxu0 0.0
        %636 = vmatpush.xpose.msra.mxu0 0.0
        %637 = vmatpush.xpose.msra.mxu0 0.0
        %638 = vmatpush.xpose.msra.mxu0 0.0
        %639 = vmatpush.xpose.msra.mxu0 0.0
        %640 = vmatpush.xpose.msra.mxu0 0.0
        %v641 = vand.u32 %v203, 4294901760
        %642 = vmatpush.xpose.msra.mxu0 %v641
        %v643 = vand.u32 %v208, 4294901760
        %644 = vmatmul.f32.gmra.mxu0 %v643
        %v645 = vpop.f32.mrf.mxu0
        %v646 = vadd.f32 %v624, %v645
        %647 = vdwg.mxu0
        %648 = vmatpush.xpose.msra.mxu0 0.0
        %649 = vmatpush.xpose.msra.mxu0 0.0
        %650 = vmatpush.xpose.msra.mxu0 0.0
        %651 = vmatpush.xpose.msra.mxu0 0.0
        %652 = vmatpush.xpose.msra.mxu0 0.0
        %653 = vmatpush.xpose.msra.mxu0 0.0
        %654 = vmatpush.xpose.msra.mxu0 0.0
        %655 = vmatpush.xpose.msra.mxu0 0.0
        %656 = vmatpush.xpose.msra.mxu0 0.0
        %657 = vmatpush.xpose.msra.mxu0 0.0
        %658 = vmatpush.xpose.msra.mxu0 0.0
        %659 = vmatpush.xpose.msra.mxu0 0.0
        %660 = vmatpush.xpose.msra.mxu0 0.0
        %661 = vmatpush.xpose.msra.mxu0 0.0
        %662 = vmatpush.xpose.msra.mxu0 0.0
        %v663 = vand.u32 %v204, 4294901760
        %664 = vmatpush.xpose.msra.mxu0 %v663
        %v665 = vand.u32 %v209, 4294901760
        %v666 = vsub.f32 %v209, %v665
        %v667 = vand.u32 %v666, 4294901760
        %v668 = vsub.f32 %v666, %v667
        %v669 = vand.u32 %v668, 4294901760
        %670 = vmatmul.f32.gmra.mxu0 %v669
        %v671 = vpop.f32.mrf.mxu0
        %v672 = vadd.f32 %v646, %v671
        %673 = vdwg.mxu0
        %674 = vmatpush.xpose.msra.mxu0 0.0
        %675 = vmatpush.xpose.msra.mxu0 0.0
        %676 = vmatpush.xpose.msra.mxu0 0.0
        %677 = vmatpush.xpose.msra.mxu0 0.0
        %678 = vmatpush.xpose.msra.mxu0 0.0
        %679 = vmatpush.xpose.msra.mxu0 0.0
        %680 = vmatpush.xpose.msra.mxu0 0.0
        %681 = vmatpush.xpose.msra.mxu0 0.0
        %682 = vmatpush.xpose.msra.mxu0 0.0
        %683 = vmatpush.xpose.msra.mxu0 0.0
        %684 = vmatpush.xpose.msra.mxu0 0.0
        %685 = vmatpush.xpose.msra.mxu0 0.0
        %686 = vmatpush.xpose.msra.mxu0 0.0
        %687 = vmatpush.xpose.msra.mxu0 0.0
        %688 = vmatpush.xpose.msra.mxu0 0.0
        %v689 = vand.u32 %v204, 4294901760
        %v690 = vsub.f32 %v204, %v689
        %v691 = vand.u32 %v690, 4294901760
        %v692 = vsub.f32 %v690, %v691
        %v693 = vand.u32 %v692, 4294901760
        %694 = vmatpush.xpose.msra.mxu0 %v693
        %v695 = vand.u32 %v209, 4294901760
        %696 = vmatmul.f32.gmra.mxu0 %v695
        %v697 = vpop.f32.mrf.mxu0
        %v698 = vadd.f32 %v672, %v697
        %699 = vdwg.mxu0
        %700 = vmatpush.xpose.msra.mxu0 0.0
        %701 = vmatpush.xpose.msra.mxu0 0.0
        %702 = vmatpush.xpose.msra.mxu0 0.0
        %703 = vmatpush.xpose.msra.mxu0 0.0
        %704 = vmatpush.xpose.msra.mxu0 0.0
        %705 = vmatpush.xpose.msra.mxu0 0.0
        %706 = vmatpush.xpose.msra.mxu0 0.0
        %707 = vmatpush.xpose.msra.mxu0 0.0
        %708 = vmatpush.xpose.msra.mxu0 0.0
        %709 = vmatpush.xpose.msra.mxu0 0.0
        %710 = vmatpush.xpose.msra.mxu0 0.0
        %711 = vmatpush.xpose.msra.mxu0 0.0
        %712 = vmatpush.xpose.msra.mxu0 0.0
        %713 = vmatpush.xpose.msra.mxu0 0.0
        %714 = vmatpush.xpose.msra.mxu0 0.0
        %v715 = vand.u32 %v204, 4294901760
        %v716 = vsub.f32 %v204, %v715
        %717 = vmatpush.xpose.msra.mxu0 %v716
        %v718 = vand.u32 %v209, 4294901760
        %v719 = vsub.f32 %v209, %v718
        %720 = vmatmul.f32.gmra.mxu0 %v719
        %v721 = vpop.f32.mrf.mxu0
        %v722 = vadd.f32 %v698, %v721
        %723 = vdwg.mxu0
        %724 = vmatpush.xpose.msra.mxu0 0.0
        %725 = vmatpush.xpose.msra.mxu0 0.0
        %726 = vmatpush.xpose.msra.mxu0 0.0
        %727 = vmatpush.xpose.msra.mxu0 0.0
        %728 = vmatpush.xpose.msra.mxu0 0.0
        %729 = vmatpush.xpose.msra.mxu0 0.0
        %730 = vmatpush.xpose.msra.mxu0 0.0
        %731 = vmatpush.xpose.msra.mxu0 0.0
        %732 = vmatpush.xpose.msra.mxu0 0.0
        %733 = vmatpush.xpose.msra.mxu0 0.0
        %734 = vmatpush.xpose.msra.mxu0 0.0
        %735 = vmatpush.xpose.msra.mxu0 0.0
        %736 = vmatpush.xpose.msra.mxu0 0.0
        %737 = vmatpush.xpose.msra.mxu0 0.0
        %738 = vmatpush.xpose.msra.mxu0 0.0
        %v739 = vand.u32 %v204, 4294901760
        %740 = vmatpush.xpose.msra.mxu0 %v739
        %v741 = vand.u32 %v209, 4294901760
        %v742 = vsub.f32 %v209, %v741
        %v743 = vand.u32 %v742, 4294901760
        %744 = vmatmul.f32.gmra.mxu0 %v743
        %v745 = vpop.f32.mrf.mxu0
        %v746 = vadd.f32 %v722, %v745
        %747 = vdwg.mxu0
        %748 = vmatpush.xpose.msra.mxu0 0.0
        %749 = vmatpush.xpose.msra.mxu0 0.0
        %750 = vmatpush.xpose.msra.mxu0 0.0
        %751 = vmatpush.xpose.msra.mxu0 0.0
        %752 = vmatpush.xpose.msra.mxu0 0.0
        %753 = vmatpush.xpose.msra.mxu0 0.0
        %754 = vmatpush.xpose.msra.mxu0 0.0
        %755 = vmatpush.xpose.msra.mxu0 0.0
        %756 = vmatpush.xpose.msra.mxu0 0.0
        %757 = vmatpush.xpose.msra.mxu0 0.0
        %758 = vmatpush.xpose.msra.mxu0 0.0
        %759 = vmatpush.xpose.msra.mxu0 0.0
        %760 = vmatpush.xpose.msra.mxu0 0.0
        %761 = vmatpush.xpose.msra.mxu0 0.0
        %762 = vmatpush.xpose.msra.mxu0 0.0
        %v763 = vand.u32 %v204, 4294901760
        %v764 = vsub.f32 %v204, %v763
        %v765 = vand.u32 %v764, 4294901760
        %766 = vmatpush.xpose.msra.mxu0 %v765
        %v767 = vand.u32 %v209, 4294901760
        %768 = vmatmul.f32.gmra.mxu0 %v767
        %v769 = vpop.f32.mrf.mxu0
        %v770 = vadd.f32 %v746, %v769
        %771 = vdwg.mxu0
        %772 = vmatpush.xpose.msra.mxu0 0.0
        %773 = vmatpush.xpose.msra.mxu0 0.0
        %774 = vmatpush.xpose.msra.mxu0 0.0
        %775 = vmatpush.xpose.msra.mxu0 0.0
        %776 = vmatpush.xpose.msra.mxu0 0.0
        %777 = vmatpush.xpose.msra.mxu0 0.0
        %778 = vmatpush.xpose.msra.mxu0 0.0
        %779 = vmatpush.xpose.msra.mxu0 0.0
        %780 = vmatpush.xpose.msra.mxu0 0.0
        %781 = vmatpush.xpose.msra.mxu0 0.0
        %782 = vmatpush.xpose.msra.mxu0 0.0
        %783 = vmatpush.xpose.msra.mxu0 0.0
        %784 = vmatpush.xpose.msra.mxu0 0.0
        %785 = vmatpush.xpose.msra.mxu0 0.0
        %786 = vmatpush.xpose.msra.mxu0 0.0
        %v787 = vand.u32 %v204, 4294901760
        %788 = vmatpush.xpose.msra.mxu0 %v787
        %v789 = vand.u32 %v209, 4294901760
        %790 = vmatmul.f32.gmra.mxu0 %v789
        %v791 = vpop.f32.mrf.mxu0
        %v792 = vadd.f32 %v770, %v791
        %793 = vdwg.mxu0
        %v794 = vadd.f32 %v205, %v792
        %vm795 = vcmask 64512
        %796 = vst.msk [vmem:[#allocation7] sm:$0xff] %vm795, %v794
        %s797 = scalar_lea.vmem [#allocation7], 8
        %v798 = vld [vmem:[%s797] sm:$0xff]
        %s799 = scalar_lea.vmem %s160, 32 [#allocation2]
        %v800 = vld [vmem:[%s799] sm:$0xff]
        %v801 = vld [vmem:[%s799 + $0x8] sm:$0xff]
        %v802 = vld [vmem:[%s799 + $0x10] sm:$0xff]
        %v803 = vld [vmem:[%s799 + $0x18] sm:$0xff]
        %804 = vmatpush.xpose.msra.mxu0 0.0
        %805 = vmatpush.xpose.msra.mxu0 0.0
        %806 = vmatpush.xpose.msra.mxu0 0.0
        %807 = vmatpush.xpose.msra.mxu0 0.0
        %808 = vmatpush.xpose.msra.mxu0 0.0
        %809 = vmatpush.xpose.msra.mxu0 0.0
        %810 = vmatpush.xpose.msra.mxu0 0.0
        %811 = vmatpush.xpose.msra.mxu0 0.0
        %812 = vmatpush.xpose.msra.mxu0 0.0
        %813 = vmatpush.xpose.msra.mxu0 0.0
        %814 = vmatpush.xpose.msra.mxu0 0.0
        %815 = vmatpush.xpose.msra.mxu0 0.0
        %816 = vmatpush.xpose.msra.mxu0 0.0
        %817 = vmatpush.xpose.msra.mxu0 0.0
        %818 = vmatpush.xpose.msra.mxu0 0.0
        %v819 = vand.u32 %v201, 4294901760
        %820 = vmatpush.xpose.msra.mxu0 %v819
        %v821 = vand.u32 %v800, 4294901760
        %v822 = vsub.f32 %v800, %v821
        %v823 = vand.u32 %v822, 4294901760
        %v824 = vsub.f32 %v822, %v823
        %v825 = vand.u32 %v824, 4294901760
        %826 = vmatmul.f32.gmra.mxu0 %v825
        %v827 = vpop.f32.mrf.mxu0
        %v828 = vadd.f32 0.0, %v827
        %829 = vdwg.mxu0
        %830 = vmatpush.xpose.msra.mxu0 0.0
        %831 = vmatpush.xpose.msra.mxu0 0.0
        %832 = vmatpush.xpose.msra.mxu0 0.0
        %833 = vmatpush.xpose.msra.mxu0 0.0
        %834 = vmatpush.xpose.msra.mxu0 0.0
        %835 = vmatpush.xpose.msra.mxu0 0.0
        %836 = vmatpush.xpose.msra.mxu0 0.0
        %837 = vmatpush.xpose.msra.mxu0 0.0
        %838 = vmatpush.xpose.msra.mxu0 0.0
        %839 = vmatpush.xpose.msra.mxu0 0.0
        %840 = vmatpush.xpose.msra.mxu0 0.0
        %841 = vmatpush.xpose.msra.mxu0 0.0
        %842 = vmatpush.xpose.msra.mxu0 0.0
        %843 = vmatpush.xpose.msra.mxu0 0.0
        %844 = vmatpush.xpose.msra.mxu0 0.0
        %v845 = vand.u32 %v201, 4294901760
        %v846 = vsub.f32 %v201, %v845
        %v847 = vand.u32 %v846, 4294901760
        %v848 = vsub.f32 %v846, %v847
        %v849 = vand.u32 %v848, 4294901760
        %850 = vmatpush.xpose.msra.mxu0 %v849
        %v851 = vand.u32 %v800, 4294901760
        %852 = vmatmul.f32.gmra.mxu0 %v851
        %v853 = vpop.f32.mrf.mxu0
        %v854 = vadd.f32 %v828, %v853
        %855 = vdwg.mxu0
        %856 = vmatpush.xpose.msra.mxu0 0.0
        %857 = vmatpush.xpose.msra.mxu0 0.0
        %858 = vmatpush.xpose.msra.mxu0 0.0
        %859 = vmatpush.xpose.msra.mxu0 0.0
        %860 = vmatpush.xpose.msra.mxu0 0.0
        %861 = vmatpush.xpose.msra.mxu0 0.0
        %862 = vmatpush.xpose.msra.mxu0 0.0
        %863 = vmatpush.xpose.msra.mxu0 0.0
        %864 = vmatpush.xpose.msra.mxu0 0.0
        %865 = vmatpush.xpose.msra.mxu0 0.0
        %866 = vmatpush.xpose.msra.mxu0 0.0
        %867 = vmatpush.xpose.msra.mxu0 0.0
        %868 = vmatpush.xpose.msra.mxu0 0.0
        %869 = vmatpush.xpose.msra.mxu0 0.0
        %870 = vmatpush.xpose.msra.mxu0 0.0
        %v871 = vand.u32 %v201, 4294901760
        %v872 = vsub.f32 %v201, %v871
        %873 = vmatpush.xpose.msra.mxu0 %v872
        %v874 = vand.u32 %v800, 4294901760
        %v875 = vsub.f32 %v800, %v874
        %876 = vmatmul.f32.gmra.mxu0 %v875
        %v877 = vpop.f32.mrf.mxu0
        %v878 = vadd.f32 %v854, %v877
        %879 = vdwg.mxu0
        %880 = vmatpush.xpose.msra.mxu0 0.0
        %881 = vmatpush.xpose.msra.mxu0 0.0
        %882 = vmatpush.xpose.msra.mxu0 0.0
        %883 = vmatpush.xpose.msra.mxu0 0.0
        %884 = vmatpush.xpose.msra.mxu0 0.0
        %885 = vmatpush.xpose.msra.mxu0 0.0
        %886 = vmatpush.xpose.msra.mxu0 0.0
        %887 = vmatpush.xpose.msra.mxu0 0.0
        %888 = vmatpush.xpose.msra.mxu0 0.0
        %889 = vmatpush.xpose.msra.mxu0 0.0
        %890 = vmatpush.xpose.msra.mxu0 0.0
        %891 = vmatpush.xpose.msra.mxu0 0.0
        %892 = vmatpush.xpose.msra.mxu0 0.0
        %893 = vmatpush.xpose.msra.mxu0 0.0
        %894 = vmatpush.xpose.msra.mxu0 0.0
        %v895 = vand.u32 %v201, 4294901760
        %896 = vmatpush.xpose.msra.mxu0 %v895
        %v897 = vand.u32 %v800, 4294901760
        %v898 = vsub.f32 %v800, %v897
        %v899 = vand.u32 %v898, 4294901760
        %900 = vmatmul.f32.gmra.mxu0 %v899
        %v901 = vpop.f32.mrf.mxu0
        %v902 = vadd.f32 %v878, %v901
        %903 = vdwg.mxu0
        %904 = vmatpush.xpose.msra.mxu0 0.0
        %905 = vmatpush.xpose.msra.mxu0 0.0
        %906 = vmatpush.xpose.msra.mxu0 0.0
        %907 = vmatpush.xpose.msra.mxu0 0.0
        %908 = vmatpush.xpose.msra.mxu0 0.0
        %909 = vmatpush.xpose.msra.mxu0 0.0
        %910 = vmatpush.xpose.msra.mxu0 0.0
        %911 = vmatpush.xpose.msra.mxu0 0.0
        %912 = vmatpush.xpose.msra.mxu0 0.0
        %913 = vmatpush.xpose.msra.mxu0 0.0
        %914 = vmatpush.xpose.msra.mxu0 0.0
        %915 = vmatpush.xpose.msra.mxu0 0.0
        %916 = vmatpush.xpose.msra.mxu0 0.0
        %917 = vmatpush.xpose.msra.mxu0 0.0
        %918 = vmatpush.xpose.msra.mxu0 0.0
        %v919 = vand.u32 %v201, 4294901760
        %v920 = vsub.f32 %v201, %v919
        %v921 = vand.u32 %v920, 4294901760
        %922 = vmatpush.xpose.msra.mxu0 %v921
        %v923 = vand.u32 %v800, 4294901760
        %924 = vmatmul.f32.gmra.mxu0 %v923
        %v925 = vpop.f32.mrf.mxu0
        %v926 = vadd.f32 %v902, %v925
        %927 = vdwg.mxu0
        %928 = vmatpush.xpose.msra.mxu0 0.0
        %929 = vmatpush.xpose.msra.mxu0 0.0
        %930 = vmatpush.xpose.msra.mxu0 0.0
        %931 = vmatpush.xpose.msra.mxu0 0.0
        %932 = vmatpush.xpose.msra.mxu0 0.0
        %933 = vmatpush.xpose.msra.mxu0 0.0
        %934 = vmatpush.xpose.msra.mxu0 0.0
        %935 = vmatpush.xpose.msra.mxu0 0.0
        %936 = vmatpush.xpose.msra.mxu0 0.0
        %937 = vmatpush.xpose.msra.mxu0 0.0
        %938 = vmatpush.xpose.msra.mxu0 0.0
        %939 = vmatpush.xpose.msra.mxu0 0.0
        %940 = vmatpush.xpose.msra.mxu0 0.0
        %941 = vmatpush.xpose.msra.mxu0 0.0
        %942 = vmatpush.xpose.msra.mxu0 0.0
        %v943 = vand.u32 %v201, 4294901760
        %944 = vmatpush.xpose.msra.mxu0 %v943
        %v945 = vand.u32 %v800, 4294901760
        %946 = vmatmul.f32.gmra.mxu0 %v945
        %v947 = vpop.f32.mrf.mxu0
        %v948 = vadd.f32 %v926, %v947
        %949 = vdwg.mxu0
        %950 = vmatpush.xpose.msra.mxu0 0.0
        %951 = vmatpush.xpose.msra.mxu0 0.0
        %952 = vmatpush.xpose.msra.mxu0 0.0
        %953 = vmatpush.xpose.msra.mxu0 0.0
        %954 = vmatpush.xpose.msra.mxu0 0.0
        %955 = vmatpush.xpose.msra.mxu0 0.0
        %956 = vmatpush.xpose.msra.mxu0 0.0
        %957 = vmatpush.xpose.msra.mxu0 0.0
        %958 = vmatpush.xpose.msra.mxu0 0.0
        %959 = vmatpush.xpose.msra.mxu0 0.0
        %960 = vmatpush.xpose.msra.mxu0 0.0
        %961 = vmatpush.xpose.msra.mxu0 0.0
        %962 = vmatpush.xpose.msra.mxu0 0.0
        %963 = vmatpush.xpose.msra.mxu0 0.0
        %964 = vmatpush.xpose.msra.mxu0 0.0
        %v965 = vand.u32 %v202, 4294901760
        %966 = vmatpush.xpose.msra.mxu0 %v965
        %v967 = vand.u32 %v801, 4294901760
        %v968 = vsub.f32 %v801, %v967
        %v969 = vand.u32 %v968, 4294901760
        %v970 = vsub.f32 %v968, %v969
        %v971 = vand.u32 %v970, 4294901760
        %972 = vmatmul.f32.gmra.mxu0 %v971
        %v973 = vpop.f32.mrf.mxu0
        %v974 = vadd.f32 %v948, %v973
        %975 = vdwg.mxu0
        %976 = vmatpush.xpose.msra.mxu0 0.0
        %977 = vmatpush.xpose.msra.mxu0 0.0
        %978 = vmatpush.xpose.msra.mxu0 0.0
        %979 = vmatpush.xpose.msra.mxu0 0.0
        %980 = vmatpush.xpose.msra.mxu0 0.0
        %981 = vmatpush.xpose.msra.mxu0 0.0
        %982 = vmatpush.xpose.msra.mxu0 0.0
        %983 = vmatpush.xpose.msra.mxu0 0.0
        %984 = vmatpush.xpose.msra.mxu0 0.0
        %985 = vmatpush.xpose.msra.mxu0 0.0
        %986 = vmatpush.xpose.msra.mxu0 0.0
        %987 = vmatpush.xpose.msra.mxu0 0.0
        %988 = vmatpush.xpose.msra.mxu0 0.0
        %989 = vmatpush.xpose.msra.mxu0 0.0
        %990 = vmatpush.xpose.msra.mxu0 0.0
        %v991 = vand.u32 %v202, 4294901760
        %v992 = vsub.f32 %v202, %v991
        %v993 = vand.u32 %v992, 4294901760
        %v994 = vsub.f32 %v992, %v993
        %v995 = vand.u32 %v994, 4294901760
        %996 = vmatpush.xpose.msra.mxu0 %v995
        %v997 = vand.u32 %v801, 4294901760
        %998 = vmatmul.f32.gmra.mxu0 %v997
        %v999 = vpop.f32.mrf.mxu0
        %v1000 = vadd.f32 %v974, %v999
        %1001 = vdwg.mxu0
        %1002 = vmatpush.xpose.msra.mxu0 0.0
        %1003 = vmatpush.xpose.msra.mxu0 0.0
        %1004 = vmatpush.xpose.msra.mxu0 0.0
        %1005 = vmatpush.xpose.msra.mxu0 0.0
        %1006 = vmatpush.xpose.msra.mxu0 0.0
        %1007 = vmatpush.xpose.msra.mxu0 0.0
        %1008 = vmatpush.xpose.msra.mxu0 0.0
        %1009 = vmatpush.xpose.msra.mxu0 0.0
        %1010 = vmatpush.xpose.msra.mxu0 0.0
        %1011 = vmatpush.xpose.msra.mxu0 0.0
        %1012 = vmatpush.xpose.msra.mxu0 0.0
        %1013 = vmatpush.xpose.msra.mxu0 0.0
        %1014 = vmatpush.xpose.msra.mxu0 0.0
        %1015 = vmatpush.xpose.msra.mxu0 0.0
        %1016 = vmatpush.xpose.msra.mxu0 0.0
        %v1017 = vand.u32 %v202, 4294901760
        %v1018 = vsub.f32 %v202, %v1017
        %1019 = vmatpush.xpose.msra.mxu0 %v1018
        %v1020 = vand.u32 %v801, 4294901760
        %v1021 = vsub.f32 %v801, %v1020
        %1022 = vmatmul.f32.gmra.mxu0 %v1021
        %v1023 = vpop.f32.mrf.mxu0
        %v1024 = vadd.f32 %v1000, %v1023
        %1025 = vdwg.mxu0
        %1026 = vmatpush.xpose.msra.mxu0 0.0
        %1027 = vmatpush.xpose.msra.mxu0 0.0
        %1028 = vmatpush.xpose.msra.mxu0 0.0
        %1029 = vmatpush.xpose.msra.mxu0 0.0
        %1030 = vmatpush.xpose.msra.mxu0 0.0
        %1031 = vmatpush.xpose.msra.mxu0 0.0
        %1032 = vmatpush.xpose.msra.mxu0 0.0
        %1033 = vmatpush.xpose.msra.mxu0 0.0
        %1034 = vmatpush.xpose.msra.mxu0 0.0
        %1035 = vmatpush.xpose.msra.mxu0 0.0
        %1036 = vmatpush.xpose.msra.mxu0 0.0
        %1037 = vmatpush.xpose.msra.mxu0 0.0
        %1038 = vmatpush.xpose.msra.mxu0 0.0
        %1039 = vmatpush.xpose.msra.mxu0 0.0
        %1040 = vmatpush.xpose.msra.mxu0 0.0
        %v1041 = vand.u32 %v202, 4294901760
        %1042 = vmatpush.xpose.msra.mxu0 %v1041
        %v1043 = vand.u32 %v801, 4294901760
        %v1044 = vsub.f32 %v801, %v1043
        %v1045 = vand.u32 %v1044, 4294901760
        %1046 = vmatmul.f32.gmra.mxu0 %v1045
        %v1047 = vpop.f32.mrf.mxu0
        %v1048 = vadd.f32 %v1024, %v1047
        %1049 = vdwg.mxu0
        %1050 = vmatpush.xpose.msra.mxu0 0.0
        %1051 = vmatpush.xpose.msra.mxu0 0.0
        %1052 = vmatpush.xpose.msra.mxu0 0.0
        %1053 = vmatpush.xpose.msra.mxu0 0.0
        %1054 = vmatpush.xpose.msra.mxu0 0.0
        %1055 = vmatpush.xpose.msra.mxu0 0.0
        %1056 = vmatpush.xpose.msra.mxu0 0.0
        %1057 = vmatpush.xpose.msra.mxu0 0.0
        %1058 = vmatpush.xpose.msra.mxu0 0.0
        %1059 = vmatpush.xpose.msra.mxu0 0.0
        %1060 = vmatpush.xpose.msra.mxu0 0.0
        %1061 = vmatpush.xpose.msra.mxu0 0.0
        %1062 = vmatpush.xpose.msra.mxu0 0.0
        %1063 = vmatpush.xpose.msra.mxu0 0.0
        %1064 = vmatpush.xpose.msra.mxu0 0.0
        %v1065 = vand.u32 %v202, 4294901760
        %v1066 = vsub.f32 %v202, %v1065
        %v1067 = vand.u32 %v1066, 4294901760
        %1068 = vmatpush.xpose.msra.mxu0 %v1067
        %v1069 = vand.u32 %v801, 4294901760
        %1070 = vmatmul.f32.gmra.mxu0 %v1069
        %v1071 = vpop.f32.mrf.mxu0
        %v1072 = vadd.f32 %v1048, %v1071
        %1073 = vdwg.mxu0
        %1074 = vmatpush.xpose.msra.mxu0 0.0
        %1075 = vmatpush.xpose.msra.mxu0 0.0
        %1076 = vmatpush.xpose.msra.mxu0 0.0
        %1077 = vmatpush.xpose.msra.mxu0 0.0
        %1078 = vmatpush.xpose.msra.mxu0 0.0
        %1079 = vmatpush.xpose.msra.mxu0 0.0
        %1080 = vmatpush.xpose.msra.mxu0 0.0
        %1081 = vmatpush.xpose.msra.mxu0 0.0
        %1082 = vmatpush.xpose.msra.mxu0 0.0
        %1083 = vmatpush.xpose.msra.mxu0 0.0
        %1084 = vmatpush.xpose.msra.mxu0 0.0
        %1085 = vmatpush.xpose.msra.mxu0 0.0
        %1086 = vmatpush.xpose.msra.mxu0 0.0
        %1087 = vmatpush.xpose.msra.mxu0 0.0
        %1088 = vmatpush.xpose.msra.mxu0 0.0
        %v1089 = vand.u32 %v202, 4294901760
        %1090 = vmatpush.xpose.msra.mxu0 %v1089
        %v1091 = vand.u32 %v801, 4294901760
        %1092 = vmatmul.f32.gmra.mxu0 %v1091
        %v1093 = vpop.f32.mrf.mxu0
        %v1094 = vadd.f32 %v1072, %v1093
        %1095 = vdwg.mxu0
        %1096 = vmatpush.xpose.msra.mxu0 0.0
        %1097 = vmatpush.xpose.msra.mxu0 0.0
        %1098 = vmatpush.xpose.msra.mxu0 0.0
        %1099 = vmatpush.xpose.msra.mxu0 0.0
        %1100 = vmatpush.xpose.msra.mxu0 0.0
        %1101 = vmatpush.xpose.msra.mxu0 0.0
        %1102 = vmatpush.xpose.msra.mxu0 0.0
        %1103 = vmatpush.xpose.msra.mxu0 0.0
        %1104 = vmatpush.xpose.msra.mxu0 0.0
        %1105 = vmatpush.xpose.msra.mxu0 0.0
        %1106 = vmatpush.xpose.msra.mxu0 0.0
        %1107 = vmatpush.xpose.msra.mxu0 0.0
        %1108 = vmatpush.xpose.msra.mxu0 0.0
        %1109 = vmatpush.xpose.msra.mxu0 0.0
        %1110 = vmatpush.xpose.msra.mxu0 0.0
        %v1111 = vand.u32 %v203, 4294901760
        %1112 = vmatpush.xpose.msra.mxu0 %v1111
        %v1113 = vand.u32 %v802, 4294901760
        %v1114 = vsub.f32 %v802, %v1113
        %v1115 = vand.u32 %v1114, 4294901760
        %v1116 = vsub.f32 %v1114, %v1115
        %v1117 = vand.u32 %v1116, 4294901760
        %1118 = vmatmul.f32.gmra.mxu0 %v1117
        %v1119 = vpop.f32.mrf.mxu0
        %v1120 = vadd.f32 %v1094, %v1119
        %1121 = vdwg.mxu0
        %1122 = vmatpush.xpose.msra.mxu0 0.0
        %1123 = vmatpush.xpose.msra.mxu0 0.0
        %1124 = vmatpush.xpose.msra.mxu0 0.0
        %1125 = vmatpush.xpose.msra.mxu0 0.0
        %1126 = vmatpush.xpose.msra.mxu0 0.0
        %1127 = vmatpush.xpose.msra.mxu0 0.0
        %1128 = vmatpush.xpose.msra.mxu0 0.0
        %1129 = vmatpush.xpose.msra.mxu0 0.0
        %1130 = vmatpush.xpose.msra.mxu0 0.0
        %1131 = vmatpush.xpose.msra.mxu0 0.0
        %1132 = vmatpush.xpose.msra.mxu0 0.0
        %1133 = vmatpush.xpose.msra.mxu0 0.0
        %1134 = vmatpush.xpose.msra.mxu0 0.0
        %1135 = vmatpush.xpose.msra.mxu0 0.0
        %1136 = vmatpush.xpose.msra.mxu0 0.0
        %v1137 = vand.u32 %v203, 4294901760
        %v1138 = vsub.f32 %v203, %v1137
        %v1139 = vand.u32 %v1138, 4294901760
        %v1140 = vsub.f32 %v1138, %v1139
        %v1141 = vand.u32 %v1140, 4294901760
        %1142 = vmatpush.xpose.msra.mxu0 %v1141
        %v1143 = vand.u32 %v802, 4294901760
        %1144 = vmatmul.f32.gmra.mxu0 %v1143
        %v1145 = vpop.f32.mrf.mxu0
        %v1146 = vadd.f32 %v1120, %v1145
        %1147 = vdwg.mxu0
        %1148 = vmatpush.xpose.msra.mxu0 0.0
        %1149 = vmatpush.xpose.msra.mxu0 0.0
        %1150 = vmatpush.xpose.msra.mxu0 0.0
        %1151 = vmatpush.xpose.msra.mxu0 0.0
        %1152 = vmatpush.xpose.msra.mxu0 0.0
        %1153 = vmatpush.xpose.msra.mxu0 0.0
        %1154 = vmatpush.xpose.msra.mxu0 0.0
        %1155 = vmatpush.xpose.msra.mxu0 0.0
        %1156 = vmatpush.xpose.msra.mxu0 0.0
        %1157 = vmatpush.xpose.msra.mxu0 0.0
        %1158 = vmatpush.xpose.msra.mxu0 0.0
        %1159 = vmatpush.xpose.msra.mxu0 0.0
        %1160 = vmatpush.xpose.msra.mxu0 0.0
        %1161 = vmatpush.xpose.msra.mxu0 0.0
        %1162 = vmatpush.xpose.msra.mxu0 0.0
        %v1163 = vand.u32 %v203, 4294901760
        %v1164 = vsub.f32 %v203, %v1163
        %1165 = vmatpush.xpose.msra.mxu0 %v1164
        %v1166 = vand.u32 %v802, 4294901760
        %v1167 = vsub.f32 %v802, %v1166
        %1168 = vmatmul.f32.gmra.mxu0 %v1167
        %v1169 = vpop.f32.mrf.mxu0
        %v1170 = vadd.f32 %v1146, %v1169
        %1171 = vdwg.mxu0
        %1172 = vmatpush.xpose.msra.mxu0 0.0
        %1173 = vmatpush.xpose.msra.mxu0 0.0
        %1174 = vmatpush.xpose.msra.mxu0 0.0
        %1175 = vmatpush.xpose.msra.mxu0 0.0
        %1176 = vmatpush.xpose.msra.mxu0 0.0
        %1177 = vmatpush.xpose.msra.mxu0 0.0
        %1178 = vmatpush.xpose.msra.mxu0 0.0
        %1179 = vmatpush.xpose.msra.mxu0 0.0
        %1180 = vmatpush.xpose.msra.mxu0 0.0
        %1181 = vmatpush.xpose.msra.mxu0 0.0
        %1182 = vmatpush.xpose.msra.mxu0 0.0
        %1183 = vmatpush.xpose.msra.mxu0 0.0
        %1184 = vmatpush.xpose.msra.mxu0 0.0
        %1185 = vmatpush.xpose.msra.mxu0 0.0
        %1186 = vmatpush.xpose.msra.mxu0 0.0
        %v1187 = vand.u32 %v203, 4294901760
        %1188 = vmatpush.xpose.msra.mxu0 %v1187
        %v1189 = vand.u32 %v802, 4294901760
        %v1190 = vsub.f32 %v802, %v1189
        %v1191 = vand.u32 %v1190, 4294901760
        %1192 = vmatmul.f32.gmra.mxu0 %v1191
        %v1193 = vpop.f32.mrf.mxu0
        %v1194 = vadd.f32 %v1170, %v1193
        %1195 = vdwg.mxu0
        %1196 = vmatpush.xpose.msra.mxu0 0.0
        %1197 = vmatpush.xpose.msra.mxu0 0.0
        %1198 = vmatpush.xpose.msra.mxu0 0.0
        %1199 = vmatpush.xpose.msra.mxu0 0.0
        %1200 = vmatpush.xpose.msra.mxu0 0.0
        %1201 = vmatpush.xpose.msra.mxu0 0.0
        %1202 = vmatpush.xpose.msra.mxu0 0.0
        %1203 = vmatpush.xpose.msra.mxu0 0.0
        %1204 = vmatpush.xpose.msra.mxu0 0.0
        %1205 = vmatpush.xpose.msra.mxu0 0.0
        %1206 = vmatpush.xpose.msra.mxu0 0.0
        %1207 = vmatpush.xpose.msra.mxu0 0.0
        %1208 = vmatpush.xpose.msra.mxu0 0.0
        %1209 = vmatpush.xpose.msra.mxu0 0.0
        %1210 = vmatpush.xpose.msra.mxu0 0.0
        %v1211 = vand.u32 %v203, 4294901760
        %v1212 = vsub.f32 %v203, %v1211
        %v1213 = vand.u32 %v1212, 4294901760
        %1214 = vmatpush.xpose.msra.mxu0 %v1213
        %v1215 = vand.u32 %v802, 4294901760
        %1216 = vmatmul.f32.gmra.mxu0 %v1215
        %v1217 = vpop.f32.mrf.mxu0
        %v1218 = vadd.f32 %v1194, %v1217
        %1219 = vdwg.mxu0
        %1220 = vmatpush.xpose.msra.mxu0 0.0
        %1221 = vmatpush.xpose.msra.mxu0 0.0
        %1222 = vmatpush.xpose.msra.mxu0 0.0
        %1223 = vmatpush.xpose.msra.mxu0 0.0
        %1224 = vmatpush.xpose.msra.mxu0 0.0
        %1225 = vmatpush.xpose.msra.mxu0 0.0
        %1226 = vmatpush.xpose.msra.mxu0 0.0
        %1227 = vmatpush.xpose.msra.mxu0 0.0
        %1228 = vmatpush.xpose.msra.mxu0 0.0
        %1229 = vmatpush.xpose.msra.mxu0 0.0
        %1230 = vmatpush.xpose.msra.mxu0 0.0
        %1231 = vmatpush.xpose.msra.mxu0 0.0
        %1232 = vmatpush.xpose.msra.mxu0 0.0
        %1233 = vmatpush.xpose.msra.mxu0 0.0
        %1234 = vmatpush.xpose.msra.mxu0 0.0
        %v1235 = vand.u32 %v203, 4294901760
        %1236 = vmatpush.xpose.msra.mxu0 %v1235
        %v1237 = vand.u32 %v802, 4294901760
        %1238 = vmatmul.f32.gmra.mxu0 %v1237
        %v1239 = vpop.f32.mrf.mxu0
        %v1240 = vadd.f32 %v1218, %v1239
        %1241 = vdwg.mxu0
        %1242 = vmatpush.xpose.msra.mxu0 0.0
        %1243 = vmatpush.xpose.msra.mxu0 0.0
        %1244 = vmatpush.xpose.msra.mxu0 0.0
        %1245 = vmatpush.xpose.msra.mxu0 0.0
        %1246 = vmatpush.xpose.msra.mxu0 0.0
        %1247 = vmatpush.xpose.msra.mxu0 0.0
        %1248 = vmatpush.xpose.msra.mxu0 0.0
        %1249 = vmatpush.xpose.msra.mxu0 0.0
        %1250 = vmatpush.xpose.msra.mxu0 0.0
        %1251 = vmatpush.xpose.msra.mxu0 0.0
        %1252 = vmatpush.xpose.msra.mxu0 0.0
        %1253 = vmatpush.xpose.msra.mxu0 0.0
        %1254 = vmatpush.xpose.msra.mxu0 0.0
        %1255 = vmatpush.xpose.msra.mxu0 0.0
        %1256 = vmatpush.xpose.msra.mxu0 0.0
        %v1257 = vand.u32 %v204, 4294901760
        %1258 = vmatpush.xpose.msra.mxu0 %v1257
        %v1259 = vand.u32 %v803, 4294901760
        %v1260 = vsub.f32 %v803, %v1259
        %v1261 = vand.u32 %v1260, 4294901760
        %v1262 = vsub.f32 %v1260, %v1261
        %v1263 = vand.u32 %v1262, 4294901760
        %1264 = vmatmul.f32.gmra.mxu0 %v1263
        %v1265 = vpop.f32.mrf.mxu0
        %v1266 = vadd.f32 %v1240, %v1265
        %1267 = vdwg.mxu0
        %1268 = vmatpush.xpose.msra.mxu0 0.0
        %1269 = vmatpush.xpose.msra.mxu0 0.0
        %1270 = vmatpush.xpose.msra.mxu0 0.0
        %1271 = vmatpush.xpose.msra.mxu0 0.0
        %1272 = vmatpush.xpose.msra.mxu0 0.0
        %1273 = vmatpush.xpose.msra.mxu0 0.0
        %1274 = vmatpush.xpose.msra.mxu0 0.0
        %1275 = vmatpush.xpose.msra.mxu0 0.0
        %1276 = vmatpush.xpose.msra.mxu0 0.0
        %1277 = vmatpush.xpose.msra.mxu0 0.0
        %1278 = vmatpush.xpose.msra.mxu0 0.0
        %1279 = vmatpush.xpose.msra.mxu0 0.0
        %1280 = vmatpush.xpose.msra.mxu0 0.0
        %1281 = vmatpush.xpose.msra.mxu0 0.0
        %1282 = vmatpush.xpose.msra.mxu0 0.0
        %v1283 = vand.u32 %v204, 4294901760
        %v1284 = vsub.f32 %v204, %v1283
        %v1285 = vand.u32 %v1284, 4294901760
        %v1286 = vsub.f32 %v1284, %v1285
        %v1287 = vand.u32 %v1286, 4294901760
        %1288 = vmatpush.xpose.msra.mxu0 %v1287
        %v1289 = vand.u32 %v803, 4294901760
        %1290 = vmatmul.f32.gmra.mxu0 %v1289
        %v1291 = vpop.f32.mrf.mxu0
        %v1292 = vadd.f32 %v1266, %v1291
        %1293 = vdwg.mxu0
        %1294 = vmatpush.xpose.msra.mxu0 0.0
        %1295 = vmatpush.xpose.msra.mxu0 0.0
        %1296 = vmatpush.xpose.msra.mxu0 0.0
        %1297 = vmatpush.xpose.msra.mxu0 0.0
        %1298 = vmatpush.xpose.msra.mxu0 0.0
        %1299 = vmatpush.xpose.msra.mxu0 0.0
        %1300 = vmatpush.xpose.msra.mxu0 0.0
        %1301 = vmatpush.xpose.msra.mxu0 0.0
        %1302 = vmatpush.xpose.msra.mxu0 0.0
        %1303 = vmatpush.xpose.msra.mxu0 0.0
        %1304 = vmatpush.xpose.msra.mxu0 0.0
        %1305 = vmatpush.xpose.msra.mxu0 0.0
        %1306 = vmatpush.xpose.msra.mxu0 0.0
        %1307 = vmatpush.xpose.msra.mxu0 0.0
        %1308 = vmatpush.xpose.msra.mxu0 0.0
        %v1309 = vand.u32 %v204, 4294901760
        %v1310 = vsub.f32 %v204, %v1309
        %1311 = vmatpush.xpose.msra.mxu0 %v1310
        %v1312 = vand.u32 %v803, 4294901760
        %v1313 = vsub.f32 %v803, %v1312
        %1314 = vmatmul.f32.gmra.mxu0 %v1313
        %v1315 = vpop.f32.mrf.mxu0
        %v1316 = vadd.f32 %v1292, %v1315
        %1317 = vdwg.mxu0
        %1318 = vmatpush.xpose.msra.mxu0 0.0
        %1319 = vmatpush.xpose.msra.mxu0 0.0
        %1320 = vmatpush.xpose.msra.mxu0 0.0
        %1321 = vmatpush.xpose.msra.mxu0 0.0
        %1322 = vmatpush.xpose.msra.mxu0 0.0
        %1323 = vmatpush.xpose.msra.mxu0 0.0
        %1324 = vmatpush.xpose.msra.mxu0 0.0
        %1325 = vmatpush.xpose.msra.mxu0 0.0
        %1326 = vmatpush.xpose.msra.mxu0 0.0
        %1327 = vmatpush.xpose.msra.mxu0 0.0
        %1328 = vmatpush.xpose.msra.mxu0 0.0
        %1329 = vmatpush.xpose.msra.mxu0 0.0
        %1330 = vmatpush.xpose.msra.mxu0 0.0
        %1331 = vmatpush.xpose.msra.mxu0 0.0
        %1332 = vmatpush.xpose.msra.mxu0 0.0
        %v1333 = vand.u32 %v204, 4294901760
        %1334 = vmatpush.xpose.msra.mxu0 %v1333
        %v1335 = vand.u32 %v803, 4294901760
        %v1336 = vsub.f32 %v803, %v1335
        %v1337 = vand.u32 %v1336, 4294901760
        %1338 = vmatmul.f32.gmra.mxu0 %v1337
        %v1339 = vpop.f32.mrf.mxu0
        %v1340 = vadd.f32 %v1316, %v1339
        %1341 = vdwg.mxu0
        %1342 = vmatpush.xpose.msra.mxu0 0.0
        %1343 = vmatpush.xpose.msra.mxu0 0.0
        %1344 = vmatpush.xpose.msra.mxu0 0.0
        %1345 = vmatpush.xpose.msra.mxu0 0.0
        %1346 = vmatpush.xpose.msra.mxu0 0.0
        %1347 = vmatpush.xpose.msra.mxu0 0.0
        %1348 = vmatpush.xpose.msra.mxu0 0.0
        %1349 = vmatpush.xpose.msra.mxu0 0.0
        %1350 = vmatpush.xpose.msra.mxu0 0.0
        %1351 = vmatpush.xpose.msra.mxu0 0.0
        %1352 = vmatpush.xpose.msra.mxu0 0.0
        %1353 = vmatpush.xpose.msra.mxu0 0.0
        %1354 = vmatpush.xpose.msra.mxu0 0.0
        %1355 = vmatpush.xpose.msra.mxu0 0.0
        %1356 = vmatpush.xpose.msra.mxu0 0.0
        %v1357 = vand.u32 %v204, 4294901760
        %v1358 = vsub.f32 %v204, %v1357
        %v1359 = vand.u32 %v1358, 4294901760
        %1360 = vmatpush.xpose.msra.mxu0 %v1359
        %v1361 = vand.u32 %v803, 4294901760
        %1362 = vmatmul.f32.gmra.mxu0 %v1361
        %v1363 = vpop.f32.mrf.mxu0
        %v1364 = vadd.f32 %v1340, %v1363
        %1365 = vdwg.mxu0
        %1366 = vmatpush.xpose.msra.mxu0 0.0
        %1367 = vmatpush.xpose.msra.mxu0 0.0
        %1368 = vmatpush.xpose.msra.mxu0 0.0
        %1369 = vmatpush.xpose.msra.mxu0 0.0
        %1370 = vmatpush.xpose.msra.mxu0 0.0
        %1371 = vmatpush.xpose.msra.mxu0 0.0
        %1372 = vmatpush.xpose.msra.mxu0 0.0
        %1373 = vmatpush.xpose.msra.mxu0 0.0
        %1374 = vmatpush.xpose.msra.mxu0 0.0
        %1375 = vmatpush.xpose.msra.mxu0 0.0
        %1376 = vmatpush.xpose.msra.mxu0 0.0
        %1377 = vmatpush.xpose.msra.mxu0 0.0
        %1378 = vmatpush.xpose.msra.mxu0 0.0
        %1379 = vmatpush.xpose.msra.mxu0 0.0
        %1380 = vmatpush.xpose.msra.mxu0 0.0
        %v1381 = vand.u32 %v204, 4294901760
        %1382 = vmatpush.xpose.msra.mxu0 %v1381
        %v1383 = vand.u32 %v803, 4294901760
        %1384 = vmatmul.f32.gmra.mxu0 %v1383
        %v1385 = vpop.f32.mrf.mxu0
        %v1386 = vadd.f32 %v1364, %v1385
        %1387 = vdwg.mxu0
        %v1388 = vadd.f32 %v798, %v1386
        %1389 = vst.msk [vmem:[%s797] sm:$0xff] %vm795, %v1388
        // Predicated region
        $region41: #{tpu_custom_call.1} parent=27 // pred_check
          %p1390 = pneg %p85
        $region42: #{tpu_custom_call.1} parent=27 // pred_check_branch
          %1392 = sbr.rel (%p1390) target = $region44
        $region43: #{tpu_custom_call.1} parent=27 // pred_region
          %1394 = vsyncadd [#allocation4], 0
          %s1395 = sshll.u32 [#allocation7], 4
          %s1396 = int_to_ptr.vmem [resolvable:$true] %s1395
          %s1397 = sshll.u32 %s2, 4
          %s1398 = int_to_ptr.hbm [resolvable:$true] %s1397
          %1403 = dma.vmem_to_hbm [thread:$0]  %s1396, 256, %s1398, [#allocation4], 128, 128, 8
        $region44: #{tpu_custom_call.1} parent=27 // pred_fallthru
          _
        // Predicated region
        $region45: #{tpu_custom_call.1} parent=27 // pred_check
          %p1404 = pneg %p85
        $region46: #{tpu_custom_call.1} parent=27 // pred_check_branch
          %1406 = sbr.rel (%p1404) target = $region48
        $region47: #{tpu_custom_call.1} parent=27 // pred_region
          %1408 = dma.done [#allocation4], 256
        $region48: #{tpu_custom_call.1} parent=27 // pred_fallthru
          _
      $region28: #{tpu_custom_call.1} parent=5 // pred_fallthru
        _
      %p1409 = scmp.le.s32.totalorder 2, %s15
      // Predicated region
      $region49: #{tpu_custom_call.1} parent=5 // pred_check
        %p1410 = pneg %p1409
      $region50: #{tpu_custom_call.1} parent=5 // pred_check_branch
        %1412 = sbr.rel (%p1410) target = $region52
      $region51: #{tpu_custom_call.1} parent=5 // pred_region
        %s1413 = ssub.s32 %s15, 2
      $region52: #{tpu_custom_call.1} parent=5 // pred_fallthru
        _
    $region6: #{tpu_custom_call.1} parent=1 // loop_footer
      %s19 = sadd.s32 1, %s15
    $region7: #{tpu_custom_call.1} parent=1 // loop_footer_branch
      %14 = sbr.rel target = $region3
    $region8: #{tpu_custom_call.1} parent=1 // loop_exit
      _
    %1414 = vsyncpa [#allocation3], 1
    %s1415 = scalar_lea.sflag [#allocation3], 1
    %1416 = vsyncpa %s1415, 1
    %1417 = vsyncpa [#allocation6], 1
    %s1418 = scalar_lea.sflag [#allocation6], 1
    %1419 = vsyncpa %s1418, 1
    %1420 = vsyncpa [#allocation4], 1
    %s1421 = scalar_lea.sflag [#allocation4], 1
    %1422 = vsyncpa %s1421, 1

</llo_original>
